<compile_context>
chip_gen: v7x
topology: tpu7x:2x2x1
jax: 0.10.0
libtpu: 0.0.40
codegen_flags: <defaults>
</compile_context>

<pallas_src>
import functools
import math

import jax
import jax.numpy as jnp
from jax.experimental import pallas as pl
from jax.experimental.pallas import tpu as pltpu

NUM_YEARS = 42
BEGIN_YEAR = 1969
BN_EPS = 1e-5
IN_WIDTH = 12 + 78       # concatenated [timbre_avg | timbre_cov]
PRED_PAD = 128           # lane-dense padded class dimension
NEG_LOGIT = -1e30        # logit for padded classes (finite: exp() -> 0 in f32)
BIAS_ROWS = 16           # packed bias/BN table rows (multiple of 8)
BIAS_LANES = 512         # packed bias/BN table width

# Row indices in the packed bias/BN table.
_ENC_B0, _ENC_B1, _ENC_B2 = 0, 1, 2
_BN_S, _BN_B = 3, 4
_LAY_B0, _LAY_B1, _LAY_B2 = 5, 6, 7
_C_B0, _C_B1, _C_B2, _C_B3 = 8, 9, 10, 11


def songs_years_kernel(x_ref, year_ref,
                       enc_w0, enc_w1, enc_w2,
                       lay_w0, lay_w1, lay_w2,
                       c_w0, c_w1, c_w2, c_w3,
                       bias_ref,
                       pred_ref):
    def b(row, width):
        # Static Ref slice: loads only the (1, width) row actually needed.
        return bias_ref[row:row + 1, :width]

    def linear(x, w_ref, brow, width):
        y = jnp.dot(x.astype(w_ref.dtype), w_ref[...],
                    preferred_element_type=jnp.float32)
        return y + b(brow, width)

    x = x_ref[...].astype(jnp.float32)                  # (TB, 90)

    # Fused (block-diagonal) residual auto-encoders + folded BatchNorm1d;
    # Dropout = identity (eval mode).
    h = jnp.maximum(linear(x, enc_w0, _ENC_B0, 256), 0.0)
    h = jnp.maximum(linear(h, enc_w1, _ENC_B1, 256), 0.0)
    coder = linear(h, enc_w2, _ENC_B2, IN_WIDTH) + x
    coder = coder * b(_BN_S, IN_WIDTH) + b(_BN_B, IN_WIDTH)

    # Fused branch feature encoders -> (TB, 512) == concat(avg_feat, cov_feat).
    h = jnp.maximum(linear(coder, lay_w0, _LAY_B0, 256), 0.0)
    h = jnp.maximum(linear(h, lay_w1, _LAY_B1, 256), 0.0)
    feat = linear(h, lay_w2, _LAY_B2, 512)

    # Classification head.
    h = jnp.maximum(linear(feat, c_w0, _C_B0, 512), 0.0)
    h = jnp.maximum(linear(h, c_w1, _C_B1, 256), 0.0)
    h = jnp.maximum(linear(h, c_w2, _C_B2, 128), 0.0)
    pred = linear(h, c_w3, _C_B3, PRED_PAD)             # (TB,128); cols>=42 = -1e30

    # Per-row cross-entropy in f32 (padded classes contribute exp(-1e30) == 0).
    m = jnp.max(pred, axis=-1, keepdims=True)
    lse = m + jnp.log(jnp.sum(jnp.exp(pred - m), axis=-1, keepdims=True))
    classes = jax.lax.broadcasted_iota(jnp.int32, pred.shape, 1)
    onehot = (classes == year_ref[...]).astype(jnp.float32)
    true_logit = jnp.sum(pred * onehot, axis=-1, keepdims=True)
    nll = lse - true_logit                              # (TB, 1)

    # Fold the NLL into the unused padded lane NUM_YEARS -> one lane-dense
    # unmasked output store (no separate (TB,1) output stream).
    out = jnp.where(classes == NUM_YEARS, nll, pred)
    pred_ref[...] = out.astype(pred_ref.dtype)


def _round_up(x, m):
    return ((x + m - 1) // m) * m


def _pad_rows(x, n_rows):
    pad = n_rows - x.shape[0]
    if pad == 0:
        return x
    return jnp.concatenate([x, jnp.zeros((pad,) + x.shape[1:], x.dtype)], axis=0)


def pack_params(params, compute_dtype):
    """10 fused weight matrices (compute_dtype) + one (16, 512) f32 bias/BN table."""
    p = list(params)
    f32 = jnp.float32

    def blockdiag(w_a, w_b):
        ia, oa = w_a.shape
        ib, ob = w_b.shape
        w = jnp.zeros((ia + ib, oa + ob), f32)
        w = w.at[:ia, :oa].set(w_a)
        w = w.at[ia:, oa:].set(w_b)
        return w

    enc_w0 = blockdiag(p[0], p[6])        # (90, 256)
    enc_w1 = blockdiag(p[2], p[8])        # (256, 256)
    enc_w2 = blockdiag(p[4], p[10])       # (256, 90)
    lay_w0 = blockdiag(p[16], p[22])      # (90, 256)
    lay_w1 = blockdiag(p[18], p[24])      # (256, 256)
    lay_w2 = blockdiag(p[20], p[26])      # (256, 512) -> concat(avg_feat, cov_feat)
    c_w0, c_w1, c_w2 = p[28], p[30], p[32]
    c_w3 = jnp.zeros((128, PRED_PAD), f32).at[:, :NUM_YEARS].set(p[34])

    weights = [w.astype(compute_dtype) for w in
               (enc_w0, enc_w1, enc_w2, lay_w0, lay_w1, lay_w2,
                c_w0, c_w1, c_w2, c_w3)]

    cat = lambda a, b: jnp.concatenate([a, b], axis=1)
    rows = [cat(p[1], p[7]),              # enc_b0  (1,256)
            cat(p[3], p[9]),              # enc_b1  (1,256)
            cat(p[5], p[11]),             # enc_b2  (1, 90)
            cat(p[12], p[14]),            # BN scale (1, 90)
            cat(p[13], p[15]),            # BN shift (1, 90)
            cat(p[17], p[23]),            # lay_b0  (1,256)
            cat(p[19], p[25]),            # lay_b1  (1,256)
            cat(p[21], p[27]),            # lay_b2  (1,512)
            p[29], p[31], p[33]]          # c_b0, c_b1, c_b2
    c_b3 = jnp.full((1, PRED_PAD), NEG_LOGIT, f32).at[:, :NUM_YEARS].set(p[35])
    rows.append(c_b3)

    bias_pack = jnp.zeros((BIAS_ROWS, BIAS_LANES), f32)
    for r, v in enumerate(rows):
        bias_pack = bias_pack.at[r, :v.shape[1]].set(v[0])
    return weights, bias_pack


@functools.partial(jax.jit, static_argnames=("block_b", "compute_dtype"))
def songs_years_forward(avg, cov, year, params, *, block_b=1024,
                        compute_dtype=jnp.bfloat16):
    B = avg.shape[0]
    weights, bias_pack = pack_params(params, compute_dtype)

    # Tile selection: amortize grid-step overhead without over-padding.
    num_tiles = -(-B // block_b)
    tb = _round_up(-(-B // num_tiles), 8)
    b_pad = _round_up(B, tb)

    x = jnp.concatenate([avg, cov], axis=1).astype(compute_dtype)   # (B, 90)
    x_p = _pad_rows(x, b_pad)
    year_lbl = (year - BEGIN_YEAR).astype(jnp.int32).reshape(B, 1)
    year_p = _pad_rows(year_lbl, b_pad)

    def batch_spec(width):
        return pl.BlockSpec((tb, width), lambda i: (i, 0))

    def resident(shape):
        # Constant index_map -> weights stay resident in VMEM across grid steps.
        return pl.BlockSpec(shape, lambda i: (0, 0))

    in_specs = ([batch_spec(IN_WIDTH), batch_spec(1)]
                + [resident(w.shape) for w in weights]
                + [resident(bias_pack.shape)])
    out_specs = batch_spec(PRED_PAD)
    out_shape = jax.ShapeDtypeStruct((b_pad, PRED_PAD), compute_dtype)

    out = pl.pallas_call(
        songs_years_kernel,
        grid=(b_pad // tb,),
        in_specs=in_specs,
        out_specs=out_specs,
        out_shape=out_shape,
        compiler_params=pltpu.CompilerParams(
            dimension_semantics=("parallel",)),
    )(x_p, year_p, *weights, bias_pack)

    out = out.astype(jnp.float32)
    pred = out[:B, :NUM_YEARS]
    loss = jnp.mean(out[:B, NUM_YEARS])   # per-row NLL folded into lane 42
    return pred, loss


def init_params(key):
    """Deterministic synthetic params. Linear weights [in, out]; biases [1, out]."""
    keys = iter(jax.random.split(key, 64))

    def linear(fan_in, fan_out):
        bound = 1.0 / math.sqrt(fan_in)
        w = jax.random.uniform(next(keys), (fan_in, fan_out), jnp.float32, -bound, bound)
        b = jax.random.uniform(next(keys), (1, fan_out), jnp.float32, -bound, bound)
        return [w, b]

    def mlp3(d_in, d_hid, d_out):
        return linear(d_in, d_hid) + linear(d_hid, d_hid) + linear(d_hid, d_out)

    def bn_fold(dim):
        gamma = jnp.ones((1, dim), jnp.float32)
        beta = jnp.zeros((1, dim), jnp.float32)
        running_mean = jnp.zeros((1, dim), jnp.float32)
        running_var = jnp.ones((1, dim), jnp.float32)
        scale = gamma / jnp.sqrt(running_var + BN_EPS)
        shift = beta - running_mean * scale
        return [scale, shift]

    params = []
    params += mlp3(12, 128, 12)          # avg_encoder
    params += mlp3(78, 128, 78)          # cov_encoder
    params += bn_fold(12) + bn_fold(78)  # bn_avg, bn_cov (folded)
    params += mlp3(12, 128, 256)         # avg_encoder_layer
    params += mlp3(78, 128, 256)         # cov_encoder_layer
    params += linear(512, 512) + linear(512, 256) + linear(256, 128) + linear(128, NUM_YEARS)
    return params


def reference_forward(avg, cov, year, params):
    p = list(params)

    def lin(x, w, b):
        return x @ w + b

    def mlp3(x, i):
        h = jnp.maximum(lin(x, p[i], p[i + 1]), 0.0)
        h = jnp.maximum(lin(h, p[i + 2], p[i + 3]), 0.0)
        return lin(h, p[i + 4], p[i + 5])

    avg_coder = (mlp3(avg, 0) + avg) * p[12] + p[13]
    cov_coder = (mlp3(cov, 6) + cov) * p[14] + p[15]
    avg_feat = mlp3(avg_coder, 16)
    cov_feat = mlp3(cov_coder, 22)
    feat = jnp.concatenate([avg_feat, cov_feat], axis=1)
    h = jnp.maximum(lin(feat, p[28], p[29]), 0.0)
    h = jnp.maximum(lin(h, p[30], p[31]), 0.0)
    h = jnp.maximum(lin(h, p[32], p[33]), 0.0)
    pred = lin(h, p[34], p[35])
    labels = (year - BEGIN_YEAR).astype(jnp.int32)
    logz = jax.nn.logsumexp(pred, axis=-1)
    tl = jnp.take_along_axis(pred, labels[:, None], axis=1)[:, 0]
    return pred, jnp.mean(logz - tl)


if __name__ == "__main__":
    key = jax.random.PRNGKey(0)
    k_p, k_avg, k_cov, k_year = jax.random.split(key, 4)

    B = 8
    params = init_params(k_p)
    avg = jax.random.normal(k_avg, (B, 12), jnp.float32)    # inputs['timbre_avg']
    cov = jax.random.normal(k_cov, (B, 78), jnp.float32)    # inputs['timbre_cov']
    year = jax.random.randint(k_year, (B,), BEGIN_YEAR, BEGIN_YEAR + NUM_YEARS, jnp.int32)

    pred_ref, loss_ref = reference_forward(avg, cov, year, params)

    # Exact-precision path (f32 MXU operands, f32 IO) — tight validation.
    pred32, loss32 = songs_years_forward(avg, cov, year, params,
                                         compute_dtype=jnp.float32)
    jax.block_until_ready((pred32, loss32))
    assert pred32.shape == (B, NUM_YEARS)
    assert jnp.allclose(pred32, pred_ref, rtol=1e-4, atol=1e-4)
    assert jnp.allclose(loss32, loss_ref, rtol=1e-4, atol=1e-4)

    # Performance path (bf16 MXU operands / IO, f32 accumulate & elementwise).
    pred16, loss16 = songs_years_forward(avg, cov, year, params,
                                         compute_dtype=jnp.bfloat16)
    jax.block_until_ready((pred16, loss16))
    assert pred16.shape == (B, NUM_YEARS)
    assert jnp.allclose(pred16, pred_ref, rtol=5e-2, atol=5e-2)
    assert jnp.allclose(loss16, loss_ref, rtol=5e-2, atol=5e-2)

    print("KERNEL_OK")
</pallas_src>

<mosaic_0001>
module attributes {stable_mosaic.version = 11 : i64} {
  func.func @songs_years_kernel(%arg0: i32, %arg1: memref<8x90xf32, #tpu.memory_space<vmem>>, %arg2: memref<8x1xi32, #tpu.memory_space<vmem>>, %arg3: memref<90x256xf32, #tpu.memory_space<vmem>>, %arg4: memref<256x256xf32, #tpu.memory_space<vmem>>, %arg5: memref<256x90xf32, #tpu.memory_space<vmem>>, %arg6: memref<90x256xf32, #tpu.memory_space<vmem>>, %arg7: memref<256x256xf32, #tpu.memory_space<vmem>>, %arg8: memref<256x512xf32, #tpu.memory_space<vmem>>, %arg9: memref<512x512xf32, #tpu.memory_space<vmem>>, %arg10: memref<512x256xf32, #tpu.memory_space<vmem>>, %arg11: memref<256x128xf32, #tpu.memory_space<vmem>>, %arg12: memref<128x128xf32, #tpu.memory_space<vmem>>, %arg13: memref<16x512xf32, #tpu.memory_space<vmem>>, %arg14: memref<8x128xf32, #tpu.memory_space<vmem>>) attributes {dimension_semantics = [#tpu.dimension_semantics<parallel>], iteration_bounds = array<i64: 1>, scalar_prefetch = 0 : i64, scratch_operands = 0 : i64, tpu.core_type = #tpu.core_type<tc>, window_params = [{transform_indices = @transform_0, window_bounds = array<i64: 8, 90>}, {transform_indices = @transform_1, window_bounds = array<i64: 8, 1>}, {pipeline_mode = #tpu.pipeline_mode<synchronous>, transform_indices = @transform_2, window_bounds = array<i64: 90, 256>}, {pipeline_mode = #tpu.pipeline_mode<synchronous>, transform_indices = @transform_3, window_bounds = array<i64: 256, 256>}, {pipeline_mode = #tpu.pipeline_mode<synchronous>, transform_indices = @transform_4, window_bounds = array<i64: 256, 90>}, {pipeline_mode = #tpu.pipeline_mode<synchronous>, transform_indices = @transform_5, window_bounds = array<i64: 90, 256>}, {pipeline_mode = #tpu.pipeline_mode<synchronous>, transform_indices = @transform_6, window_bounds = array<i64: 256, 256>}, {pipeline_mode = #tpu.pipeline_mode<synchronous>, transform_indices = @transform_7, window_bounds = array<i64: 256, 512>}, {pipeline_mode = #tpu.pipeline_mode<synchronous>, transform_indices = @transform_8, window_bounds = array<i64: 512, 512>}, {pipeline_mode = #tpu.pipeline_mode<synchronous>, transform_indices = @transform_9, window_bounds = array<i64: 512, 256>}, {pipeline_mode = #tpu.pipeline_mode<synchronous>, transform_indices = @transform_10, window_bounds = array<i64: 256, 128>}, {pipeline_mode = #tpu.pipeline_mode<synchronous>, transform_indices = @transform_11, window_bounds = array<i64: 128, 128>}, {pipeline_mode = #tpu.pipeline_mode<synchronous>, transform_indices = @transform_12, window_bounds = array<i64: 16, 512>}, {transform_indices = @transform_13, window_bounds = array<i64: 8, 128>}]} {
    %c0 = arith.constant 0 : index
    %c0_0 = arith.constant 0 : index
    %0 = vector.load %arg1[%c0, %c0_0] : memref<8x90xf32, #tpu.memory_space<vmem>>, vector<8x90xf32>
    %c0_1 = arith.constant 0 : index
    %c0_2 = arith.constant 0 : index
    %1 = vector.load %arg3[%c0_1, %c0_2] : memref<90x256xf32, #tpu.memory_space<vmem>>, vector<90x256xf32>
    %cst = arith.constant dense<0.000000e+00> : vector<8x256xf32>
    %2 = tpu.matmul %0, %1, %cst {dimension_numbers = #tpu.dot_dimension_numbers<[1], [0], [0], [1], [0, 0, 1, 1], [], []>} : vector<8x90xf32>, vector<90x256xf32>, vector<8x256xf32> -> vector<8x256xf32>
    %c0_3 = arith.constant 0 : index
    %c0_4 = arith.constant 0 : index
    %3 = vector.load %arg13[%c0_3, %c0_4] : memref<16x512xf32, #tpu.memory_space<vmem>>, vector<1x256xf32>
    %4 = vector.broadcast %3 : vector<1x256xf32> to vector<8x256xf32>
    %5 = arith.addf %2, %4 : vector<8x256xf32>
    %cst_5 = arith.constant 0.000000e+00 : f32
    %6 = vector.broadcast %cst_5 : f32 to vector<8x256xf32>
    %7 = arith.maximumf %5, %6 : vector<8x256xf32>
    %c0_6 = arith.constant 0 : index
    %c0_7 = arith.constant 0 : index
    %8 = vector.load %arg4[%c0_6, %c0_7] : memref<256x256xf32, #tpu.memory_space<vmem>>, vector<256x256xf32>
    %cst_8 = arith.constant dense<0.000000e+00> : vector<8x256xf32>
    %9 = tpu.matmul %7, %8, %cst_8 {dimension_numbers = #tpu.dot_dimension_numbers<[1], [0], [0], [1], [0, 0, 1, 1], [], []>} : vector<8x256xf32>, vector<256x256xf32>, vector<8x256xf32> -> vector<8x256xf32>
    %c1 = arith.constant 1 : index
    %c0_9 = arith.constant 0 : index
    %10 = vector.load %arg13[%c1, %c0_9] : memref<16x512xf32, #tpu.memory_space<vmem>>, vector<1x256xf32>
    %11 = vector.broadcast %10 : vector<1x256xf32> to vector<8x256xf32>
    %12 = arith.addf %9, %11 : vector<8x256xf32>
    %cst_10 = arith.constant 0.000000e+00 : f32
    %13 = vector.broadcast %cst_10 : f32 to vector<8x256xf32>
    %14 = arith.maximumf %12, %13 : vector<8x256xf32>
    %c0_11 = arith.constant 0 : index
    %c0_12 = arith.constant 0 : index
    %15 = vector.load %arg5[%c0_11, %c0_12] : memref<256x90xf32, #tpu.memory_space<vmem>>, vector<256x90xf32>
    %cst_13 = arith.constant dense<0.000000e+00> : vector<8x90xf32>
    %16 = tpu.matmul %14, %15, %cst_13 {dimension_numbers = #tpu.dot_dimension_numbers<[1], [0], [0], [1], [0, 0, 1, 1], [], []>} : vector<8x256xf32>, vector<256x90xf32>, vector<8x90xf32> -> vector<8x90xf32>
    %c2 = arith.constant 2 : index
    %c0_14 = arith.constant 0 : index
    %17 = vector.load %arg13[%c2, %c0_14] : memref<16x512xf32, #tpu.memory_space<vmem>>, vector<1x90xf32>
    %18 = vector.broadcast %17 : vector<1x90xf32> to vector<8x90xf32>
    %19 = arith.addf %16, %18 : vector<8x90xf32>
    %20 = arith.addf %19, %0 : vector<8x90xf32>
    %c3 = arith.constant 3 : index
    %c0_15 = arith.constant 0 : index
    %21 = vector.load %arg13[%c3, %c0_15] : memref<16x512xf32, #tpu.memory_space<vmem>>, vector<1x90xf32>
    %22 = vector.broadcast %21 : vector<1x90xf32> to vector<8x90xf32>
    %23 = arith.mulf %20, %22 : vector<8x90xf32>
    %c4 = arith.constant 4 : index
    %c0_16 = arith.constant 0 : index
    %24 = vector.load %arg13[%c4, %c0_16] : memref<16x512xf32, #tpu.memory_space<vmem>>, vector<1x90xf32>
    %25 = vector.broadcast %24 : vector<1x90xf32> to vector<8x90xf32>
    %26 = arith.addf %23, %25 : vector<8x90xf32>
    %c0_17 = arith.constant 0 : index
    %c0_18 = arith.constant 0 : index
    %27 = vector.load %arg6[%c0_17, %c0_18] : memref<90x256xf32, #tpu.memory_space<vmem>>, vector<90x256xf32>
    %cst_19 = arith.constant dense<0.000000e+00> : vector<8x256xf32>
    %28 = tpu.matmul %26, %27, %cst_19 {dimension_numbers = #tpu.dot_dimension_numbers<[1], [0], [0], [1], [0, 0, 1, 1], [], []>} : vector<8x90xf32>, vector<90x256xf32>, vector<8x256xf32> -> vector<8x256xf32>
    %c5 = arith.constant 5 : index
    %c0_20 = arith.constant 0 : index
    %29 = vector.load %arg13[%c5, %c0_20] : memref<16x512xf32, #tpu.memory_space<vmem>>, vector<1x256xf32>
    %30 = vector.broadcast %29 : vector<1x256xf32> to vector<8x256xf32>
    %31 = arith.addf %28, %30 : vector<8x256xf32>
    %cst_21 = arith.constant 0.000000e+00 : f32
    %32 = vector.broadcast %cst_21 : f32 to vector<8x256xf32>
    %33 = arith.maximumf %31, %32 : vector<8x256xf32>
    %c0_22 = arith.constant 0 : index
    %c0_23 = arith.constant 0 : index
    %34 = vector.load %arg7[%c0_22, %c0_23] : memref<256x256xf32, #tpu.memory_space<vmem>>, vector<256x256xf32>
    %cst_24 = arith.constant dense<0.000000e+00> : vector<8x256xf32>
    %35 = tpu.matmul %33, %34, %cst_24 {dimension_numbers = #tpu.dot_dimension_numbers<[1], [0], [0], [1], [0, 0, 1, 1], [], []>} : vector<8x256xf32>, vector<256x256xf32>, vector<8x256xf32> -> vector<8x256xf32>
    %c6 = arith.constant 6 : index
    %c0_25 = arith.constant 0 : index
    %36 = vector.load %arg13[%c6, %c0_25] : memref<16x512xf32, #tpu.memory_space<vmem>>, vector<1x256xf32>
    %37 = vector.broadcast %36 : vector<1x256xf32> to vector<8x256xf32>
    %38 = arith.addf %35, %37 : vector<8x256xf32>
    %cst_26 = arith.constant 0.000000e+00 : f32
    %39 = vector.broadcast %cst_26 : f32 to vector<8x256xf32>
    %40 = arith.maximumf %38, %39 : vector<8x256xf32>
    %c0_27 = arith.constant 0 : index
    %c0_28 = arith.constant 0 : index
    %41 = vector.load %arg8[%c0_27, %c0_28] : memref<256x512xf32, #tpu.memory_space<vmem>>, vector<256x512xf32>
    %cst_29 = arith.constant dense<0.000000e+00> : vector<8x512xf32>
    %42 = tpu.matmul %40, %41, %cst_29 {dimension_numbers = #tpu.dot_dimension_numbers<[1], [0], [0], [1], [0, 0, 1, 1], [], []>} : vector<8x256xf32>, vector<256x512xf32>, vector<8x512xf32> -> vector<8x512xf32>
    %c7 = arith.constant 7 : index
    %c0_30 = arith.constant 0 : index
    %43 = vector.load %arg13[%c7, %c0_30] : memref<16x512xf32, #tpu.memory_space<vmem>>, vector<1x512xf32>
    %44 = vector.broadcast %43 : vector<1x512xf32> to vector<8x512xf32>
    %45 = arith.addf %42, %44 : vector<8x512xf32>
    %c0_31 = arith.constant 0 : index
    %c0_32 = arith.constant 0 : index
    %46 = vector.load %arg9[%c0_31, %c0_32] : memref<512x512xf32, #tpu.memory_space<vmem>>, vector<512x512xf32>
    %cst_33 = arith.constant dense<0.000000e+00> : vector<8x512xf32>
    %47 = tpu.matmul %45, %46, %cst_33 {dimension_numbers = #tpu.dot_dimension_numbers<[1], [0], [0], [1], [0, 0, 1, 1], [], []>} : vector<8x512xf32>, vector<512x512xf32>, vector<8x512xf32> -> vector<8x512xf32>
    %c8 = arith.constant 8 : index
    %c0_34 = arith.constant 0 : index
    %48 = vector.load %arg13[%c8, %c0_34] : memref<16x512xf32, #tpu.memory_space<vmem>>, vector<1x512xf32>
    %49 = vector.broadcast %48 : vector<1x512xf32> to vector<8x512xf32>
    %50 = arith.addf %47, %49 : vector<8x512xf32>
    %cst_35 = arith.constant 0.000000e+00 : f32
    %51 = vector.broadcast %cst_35 : f32 to vector<8x512xf32>
    %52 = arith.maximumf %50, %51 : vector<8x512xf32>
    %c0_36 = arith.constant 0 : index
    %c0_37 = arith.constant 0 : index
    %53 = vector.load %arg10[%c0_36, %c0_37] : memref<512x256xf32, #tpu.memory_space<vmem>>, vector<512x256xf32>
    %cst_38 = arith.constant dense<0.000000e+00> : vector<8x256xf32>
    %54 = tpu.matmul %52, %53, %cst_38 {dimension_numbers = #tpu.dot_dimension_numbers<[1], [0], [0], [1], [0, 0, 1, 1], [], []>} : vector<8x512xf32>, vector<512x256xf32>, vector<8x256xf32> -> vector<8x256xf32>
    %c9 = arith.constant 9 : index
    %c0_39 = arith.constant 0 : index
    %55 = vector.load %arg13[%c9, %c0_39] : memref<16x512xf32, #tpu.memory_space<vmem>>, vector<1x256xf32>
    %56 = vector.broadcast %55 : vector<1x256xf32> to vector<8x256xf32>
    %57 = arith.addf %54, %56 : vector<8x256xf32>
    %cst_40 = arith.constant 0.000000e+00 : f32
    %58 = vector.broadcast %cst_40 : f32 to vector<8x256xf32>
    %59 = arith.maximumf %57, %58 : vector<8x256xf32>
    %c0_41 = arith.constant 0 : index
    %c0_42 = arith.constant 0 : index
    %60 = vector.load %arg11[%c0_41, %c0_42] : memref<256x128xf32, #tpu.memory_space<vmem>>, vector<256x128xf32>
    %cst_43 = arith.constant dense<0.000000e+00> : vector<8x128xf32>
    %61 = tpu.matmul %59, %60, %cst_43 {dimension_numbers = #tpu.dot_dimension_numbers<[1], [0], [0], [1], [0, 0, 1, 1], [], []>} : vector<8x256xf32>, vector<256x128xf32>, vector<8x128xf32> -> vector<8x128xf32>
    %c10 = arith.constant 10 : index
    %c0_44 = arith.constant 0 : index
    %62 = vector.load %arg13[%c10, %c0_44] : memref<16x512xf32, #tpu.memory_space<vmem>>, vector<1x128xf32>
    %63 = vector.broadcast %62 : vector<1x128xf32> to vector<8x128xf32>
    %64 = arith.addf %61, %63 : vector<8x128xf32>
    %cst_45 = arith.constant 0.000000e+00 : f32
    %65 = vector.broadcast %cst_45 : f32 to vector<8x128xf32>
    %66 = arith.maximumf %64, %65 : vector<8x128xf32>
    %c0_46 = arith.constant 0 : index
    %c0_47 = arith.constant 0 : index
    %67 = vector.load %arg12[%c0_46, %c0_47] : memref<128x128xf32, #tpu.memory_space<vmem>>, vector<128x128xf32>
    %cst_48 = arith.constant dense<0.000000e+00> : vector<8x128xf32>
    %68 = tpu.matmul %66, %67, %cst_48 {dimension_numbers = #tpu.dot_dimension_numbers<[1], [0], [0], [1], [0, 0, 1, 1], [], []>} : vector<8x128xf32>, vector<128x128xf32>, vector<8x128xf32> -> vector<8x128xf32>
    %c11 = arith.constant 11 : index
    %c0_49 = arith.constant 0 : index
    %69 = vector.load %arg13[%c11, %c0_49] : memref<16x512xf32, #tpu.memory_space<vmem>>, vector<1x128xf32>
    %70 = vector.broadcast %69 : vector<1x128xf32> to vector<8x128xf32>
    %71 = arith.addf %68, %70 : vector<8x128xf32>
    %cst_50 = arith.constant dense<0xFF800000> : vector<8xf32>
    %72 = vector.multi_reduction <maximumf>, %71, %cst_50 [1] : vector<8x128xf32> to vector<8xf32>
    %73 = vector.shape_cast %72 : vector<8xf32> to vector<8x1xf32>
    %74 = vector.broadcast %73 : vector<8x1xf32> to vector<8x128xf32>
    %75 = arith.subf %71, %74 : vector<8x128xf32>
    %76 = math.exp %75 : vector<8x128xf32>
    %cst_51 = arith.constant dense<0.000000e+00> : vector<8xf32>
    %77 = vector.multi_reduction <add>, %76, %cst_51 [1] : vector<8x128xf32> to vector<8xf32>
    %78 = vector.shape_cast %77 : vector<8xf32> to vector<8x1xf32>
    %79 = math.log %78 : vector<8x1xf32>
    %80 = arith.addf %73, %79 : vector<8x1xf32>
    %81 = tpu.iota {dimensions = array<i32: 1>} : vector<8x128xi32>
    %c0_52 = arith.constant 0 : index
    %c0_53 = arith.constant 0 : index
    %82 = vector.load %arg2[%c0_52, %c0_53] : memref<8x1xi32, #tpu.memory_space<vmem>>, vector<8x1xi32>
    %83 = vector.broadcast %82 : vector<8x1xi32> to vector<8x128xi32>
    %84 = arith.cmpi eq, %81, %83 : vector<8x128xi32>
    %85 = arith.extui %84 : vector<8x128xi1> to vector<8x128xi32>
    %86 = arith.sitofp %85 : vector<8x128xi32> to vector<8x128xf32>
    %87 = arith.mulf %71, %86 : vector<8x128xf32>
    %cst_54 = arith.constant dense<0.000000e+00> : vector<8xf32>
    %88 = vector.multi_reduction <add>, %87, %cst_54 [1] : vector<8x128xf32> to vector<8xf32>
    %89 = vector.shape_cast %88 : vector<8xf32> to vector<8x1xf32>
    %90 = arith.subf %80, %89 : vector<8x1xf32>
    %c42_i32 = arith.constant 42 : i32
    %91 = vector.broadcast %c42_i32 : i32 to vector<8x128xi32>
    %92 = arith.cmpi eq, %81, %91 : vector<8x128xi32>
    %93 = vector.shape_cast %90 : vector<8x1xf32> to vector<8x1xf32>
    %94 = vector.broadcast %93 : vector<8x1xf32> to vector<8x128xf32>
    %95 = arith.select %92, %94, %71 : vector<8x128xi1>, vector<8x128xf32>
    %c0_55 = arith.constant 0 : index
    %c0_56 = arith.constant 0 : index
    %96 = vector.load %arg14[%c0_55, %c0_56] : memref<8x128xf32, #tpu.memory_space<vmem>>, vector<8x128xf32>
    tpu.vector_store %arg14[%c0_55, %c0_56], %95 {strides = array<i32>} : memref<8x128xf32, #tpu.memory_space<vmem>>, vector<8x128xf32>,
    return
  }
  func.func @transform_0(%arg0: i32) -> (i32, i32) {
    %c0_i32 = arith.constant 0 : i32
    %c0_i32_0 = arith.constant 0 : i32
    return %arg0, %c0_i32 : i32, i32
  }
  func.func @transform_1(%arg0: i32) -> (i32, i32) {
    %c0_i32 = arith.constant 0 : i32
    %c0_i32_0 = arith.constant 0 : i32
    return %arg0, %c0_i32 : i32, i32
  }
  func.func @transform_2(%arg0: i32) -> (i32, i32) {
    %c0_i32 = arith.constant 0 : i32
    %c0_i32_0 = arith.constant 0 : i32
    %c0_i32_1 = arith.constant 0 : i32
    return %c0_i32, %c0_i32_0 : i32, i32
  }
  func.func @transform_3(%arg0: i32) -> (i32, i32) {
    %c0_i32 = arith.constant 0 : i32
    %c0_i32_0 = arith.constant 0 : i32
    %c0_i32_1 = arith.constant 0 : i32
    return %c0_i32, %c0_i32_0 : i32, i32
  }
  func.func @transform_4(%arg0: i32) -> (i32, i32) {
    %c0_i32 = arith.constant 0 : i32
    %c0_i32_0 = arith.constant 0 : i32
    %c0_i32_1 = arith.constant 0 : i32
    return %c0_i32, %c0_i32_0 : i32, i32
  }
  func.func @transform_5(%arg0: i32) -> (i32, i32) {
    %c0_i32 = arith.constant 0 : i32
    %c0_i32_0 = arith.constant 0 : i32
    %c0_i32_1 = arith.constant 0 : i32
    return %c0_i32, %c0_i32_0 : i32, i32
  }
  func.func @transform_6(%arg0: i32) -> (i32, i32) {
    %c0_i32 = arith.constant 0 : i32
    %c0_i32_0 = arith.constant 0 : i32
    %c0_i32_1 = arith.constant 0 : i32
    return %c0_i32, %c0_i32_0 : i32, i32
  }
  func.func @transform_7(%arg0: i32) -> (i32, i32) {
    %c0_i32 = arith.constant 0 : i32
    %c0_i32_0 = arith.constant 0 : i32
    %c0_i32_1 = arith.constant 0 : i32
    return %c0_i32, %c0_i32_0 : i32, i32
  }
  func.func @transform_8(%arg0: i32) -> (i32, i32) {
    %c0_i32 = arith.constant 0 : i32
    %c0_i32_0 = arith.constant 0 : i32
    %c0_i32_1 = arith.constant 0 : i32
    return %c0_i32, %c0_i32_0 : i32, i32
  }
  func.func @transform_9(%arg0: i32) -> (i32, i32) {
    %c0_i32 = arith.constant 0 : i32
    %c0_i32_0 = arith.constant 0 : i32
    %c0_i32_1 = arith.constant 0 : i32
    return %c0_i32, %c0_i32_0 : i32, i32
  }
  func.func @transform_10(%arg0: i32) -> (i32, i32) {
    %c0_i32 = arith.constant 0 : i32
    %c0_i32_0 = arith.constant 0 : i32
    %c0_i32_1 = arith.constant 0 : i32
    return %c0_i32, %c0_i32_0 : i32, i32
  }
  func.func @transform_11(%arg0: i32) -> (i32, i32) {
    %c0_i32 = arith.constant 0 : i32
    %c0_i32_0 = arith.constant 0 : i32
    %c0_i32_1 = arith.constant 0 : i32
    return %c0_i32, %c0_i32_0 : i32, i32
  }
  func.func @transform_12(%arg0: i32) -> (i32, i32) {
    %c0_i32 = arith.constant 0 : i32
    %c0_i32_0 = arith.constant 0 : i32
    %c0_i32_1 = arith.constant 0 : i32
    return %c0_i32, %c0_i32_0 : i32, i32
  }
  func.func @transform_13(%arg0: i32) -> (i32, i32) {
    %c0_i32 = arith.constant 0 : i32
    %c0_i32_0 = arith.constant 0 : i32
    return %arg0, %c0_i32 : i32, i32
  }
}

</mosaic_0001>

<llo_original>
// kernel: songs_years_forward.1
$region0: #{songs_years_forward.1}
  #allocation0 [shape = 'u32[]', space=smem, size = 0x4, offset = 0x4, fixed_abs, tag = 'smem constant byte address 0x4 - core index']
  #allocation1 [shape = 'u32[144,128]{1,0:T(1,128)}', space=vmem, size = 0x12000, scoped, tag = 'internal scratch']
  %s0 = inlined_call_operand.vmem [shape: f32[8,90], index: 0, kind: input, shape index: {}]
  %s1 = inlined_call_operand.vmem [shape: s32[8,1], index: 1, kind: input, shape index: {}]
  %s2 = inlined_call_operand.vmem [shape: f32[90,256], index: 2, kind: input, shape index: {}]
  %s3 = inlined_call_operand.vmem [shape: f32[256,256], index: 3, kind: input, shape index: {}]
  %s4 = inlined_call_operand.vmem [shape: f32[256,90], index: 4, kind: input, shape index: {}]
  %s5 = inlined_call_operand.vmem [shape: f32[90,256], index: 5, kind: input, shape index: {}]
  %s6 = inlined_call_operand.vmem [shape: f32[256,256], index: 6, kind: input, shape index: {}]
  %s7 = inlined_call_operand.vmem [shape: f32[256,512], index: 7, kind: input, shape index: {}]
  %s8 = inlined_call_operand.vmem [shape: f32[512,512], index: 8, kind: input, shape index: {}]
  %s9 = inlined_call_operand.vmem [shape: f32[512,256], index: 9, kind: input, shape index: {}]
  %s10 = inlined_call_operand.vmem [shape: f32[256,128], index: 10, kind: input, shape index: {}]
  %s11 = inlined_call_operand.vmem [shape: f32[128,128], index: 11, kind: input, shape index: {}]
  %s12 = inlined_call_operand.vmem [shape: f32[16,512], index: 12, kind: input, shape index: {}]
  %s13 = inlined_call_operand.vmem [shape: f32[8,128], index: 13, kind: output, shape index: {}]
  %s14 = sld [smem:[#allocation0]]
  $region62: #{songs_years_forward.1} parent=0
    _
  %s16 = ssub.s32 1, %s14
  %s17 = scalar_select 0, %s16, %s14
  // Predicated region
  $region2: #{songs_years_forward.1} parent=0 // pred_check
    _
  $region3: #{songs_years_forward.1} parent=0 // pred_check_branch
    %19 = sbr.rel (0) target = $region5
  $region4: #{songs_years_forward.1} parent=0 // pred_region
    _
  $region5: #{songs_years_forward.1} parent=0 // pred_fallthru
    _
  // Predicated region
  $region6: #{songs_years_forward.1} parent=0 // pred_check
    _
  $region7: #{songs_years_forward.1} parent=0 // pred_check_branch
    %21 = sbr.rel (0) target = $region9
  $region8: #{songs_years_forward.1} parent=0 // pred_region
    _
  $region9: #{songs_years_forward.1} parent=0 // pred_fallthru
    _
  // Predicated region
  $region10: #{songs_years_forward.1} parent=0 // pred_check
    _
  $region11: #{songs_years_forward.1} parent=0 // pred_check_branch
    %23 = sbr.rel (0) target = $region13
  $region12: #{songs_years_forward.1} parent=0 // pred_region
    _
  $region13: #{songs_years_forward.1} parent=0 // pred_fallthru
    _
  // Predicated region
  $region14: #{songs_years_forward.1} parent=0 // pred_check
    _
  $region15: #{songs_years_forward.1} parent=0 // pred_check_branch
    %25 = sbr.rel (0) target = $region17
  $region16: #{songs_years_forward.1} parent=0 // pred_region
    _
  $region17: #{songs_years_forward.1} parent=0 // pred_fallthru
    _
  // Predicated region
  $region18: #{songs_years_forward.1} parent=0 // pred_check
    _
  $region19: #{songs_years_forward.1} parent=0 // pred_check_branch
    %27 = sbr.rel (0) target = $region21
  $region20: #{songs_years_forward.1} parent=0 // pred_region
    _
  $region21: #{songs_years_forward.1} parent=0 // pred_fallthru
    _
  // Predicated region
  $region22: #{songs_years_forward.1} parent=0 // pred_check
    _
  $region23: #{songs_years_forward.1} parent=0 // pred_check_branch
    %29 = sbr.rel (0) target = $region25
  $region24: #{songs_years_forward.1} parent=0 // pred_region
    _
  $region25: #{songs_years_forward.1} parent=0 // pred_fallthru
    _
  // Predicated region
  $region26: #{songs_years_forward.1} parent=0 // pred_check
    _
  $region27: #{songs_years_forward.1} parent=0 // pred_check_branch
    %31 = sbr.rel (0) target = $region29
  $region28: #{songs_years_forward.1} parent=0 // pred_region
    _
  $region29: #{songs_years_forward.1} parent=0 // pred_fallthru
    _
  // Predicated region
  $region30: #{songs_years_forward.1} parent=0 // pred_check
    _
  $region31: #{songs_years_forward.1} parent=0 // pred_check_branch
    %33 = sbr.rel (0) target = $region33
  $region32: #{songs_years_forward.1} parent=0 // pred_region
    _
  $region33: #{songs_years_forward.1} parent=0 // pred_fallthru
    _
  // Predicated region
  $region34: #{songs_years_forward.1} parent=0 // pred_check
    _
  $region35: #{songs_years_forward.1} parent=0 // pred_check_branch
    %35 = sbr.rel (0) target = $region37
  $region36: #{songs_years_forward.1} parent=0 // pred_region
    _
  $region37: #{songs_years_forward.1} parent=0 // pred_fallthru
    _
  // Predicated region
  $region38: #{songs_years_forward.1} parent=0 // pred_check
    _
  $region39: #{songs_years_forward.1} parent=0 // pred_check_branch
    %37 = sbr.rel (0) target = $region41
  $region40: #{songs_years_forward.1} parent=0 // pred_region
    _
  $region41: #{songs_years_forward.1} parent=0 // pred_fallthru
    _
  // Predicated region
  $region42: #{songs_years_forward.1} parent=0 // pred_check
    _
  $region43: #{songs_years_forward.1} parent=0 // pred_check_branch
    %39 = sbr.rel (0) target = $region45
  $region44: #{songs_years_forward.1} parent=0 // pred_region
    _
  $region45: #{songs_years_forward.1} parent=0 // pred_fallthru
    _
  // Predicated region
  $region46: #{songs_years_forward.1} parent=0 // pred_check
    _
  $region47: #{songs_years_forward.1} parent=0 // pred_check_branch
    %41 = sbr.rel (0) target = $region49
  $region48: #{songs_years_forward.1} parent=0 // pred_region
    _
  $region49: #{songs_years_forward.1} parent=0 // pred_fallthru
    _
  // Predicated region
  $region50: #{songs_years_forward.1} parent=0 // pred_check
    _
  $region51: #{songs_years_forward.1} parent=0 // pred_check_branch
    %43 = sbr.rel (0) target = $region53
  $region52: #{songs_years_forward.1} parent=0 // pred_region
    _
  $region53: #{songs_years_forward.1} parent=0 // pred_fallthru
    _
  %v44 = vld [vmem:[%s0] sm:$0xff]
  %v45 = vld [vmem:[%s2] sm:$0xff]
  %v46 = vld [vmem:[%s2 + $0x8] sm:$0xff]
  %v47 = vld [vmem:[%s2 + $0x10] sm:$0xff]
  %v48 = vld [vmem:[%s2 + $0x18] sm:$0xff]
  %v49 = vld [vmem:[%s2 + $0x20] sm:$0xff]
  %v50 = vld [vmem:[%s2 + $0x28] sm:$0xff]
  %v51 = vld [vmem:[%s2 + $0x30] sm:$0xff]
  %v52 = vld [vmem:[%s2 + $0x38] sm:$0xff]
  %v53 = vld [vmem:[%s2 + $0x40] sm:$0xff]
  %v54 = vld [vmem:[%s2 + $0x48] sm:$0xff]
  %v55 = vld [vmem:[%s2 + $0x50] sm:$0xff]
  %v56 = vld [vmem:[%s2 + $0x58] sm:$0xff]
  %v57 = vld [vmem:[%s2 + $0x60] sm:$0xff]
  %v58 = vld [vmem:[%s2 + $0x68] sm:$0xff]
  %v59 = vld [vmem:[%s2 + $0x70] sm:$0xff]
  %v60 = vld [vmem:[%s2 + $0x78] sm:$0xff]
  %v61 = vld [vmem:[%s2 + $0x80] sm:$0xff]
  %v62 = vld [vmem:[%s2 + $0x88] sm:$0xff]
  %v63 = vld [vmem:[%s2 + $0x90] sm:$0xff]
  %v64 = vld [vmem:[%s2 + $0x98] sm:$0xff]
  %v65 = vld [vmem:[%s2 + $0xa0] sm:$0xff]
  %v66 = vld [vmem:[%s2 + $0xa8] sm:$0xff]
  %v67 = vld [vmem:[%s2 + $0xb0] sm:$0x3]
  %v68 = vld [vmem:[%s2 + $0xb8] sm:$0x3]
  %v69 = vld [vmem:[%s12] ss:$8 sm:$0x3]
  %v71 = vlaneseq
  %v72 = vshrl.u32 %v71, 7
  %v73 = vsub.s32 0, %v72
  %v74 = vrot.slane %v69, %v73
  %v75 = vlaneseq
  %v76 = vshrl.u32 %v75, 7
  %v77 = vsub.s32 1, %v76
  %v78 = vrot.slane %v69, %v77
  %vm81 = vcmask 736256
  %v83 = vsel %vm81, %v44, 0
  %vm85 = vcmask 1041408
  %v87 = vsel %vm85, %v67, 0
  %v90 = vsel %vm85, %v68, 0
  %92 = vmatprep.subr.mxu0 %v46
  %93 = vmatpush1.msra.mxu0 %v45
  %94 = vmatprep.subr.mxu0 %v48
  %95 = vmatpush1.msra.mxu0 %v47
  %96 = vmatprep.subr.mxu0 %v50
  %97 = vmatpush1.msra.mxu0 %v49
  %98 = vmatprep.subr.mxu0 %v52
  %99 = vmatpush1.msra.mxu0 %v51
  %100 = vmatprep.subr.mxu0 %v54
  %101 = vmatpush1.msra.mxu0 %v53
  %102 = vmatprep.subr.mxu0 %v56
  %103 = vmatpush1.msra.mxu0 %v55
  %104 = vmatprep.subr.mxu0 %v58
  %105 = vmatpush1.msra.mxu0 %v57
  %106 = vmatprep.subr.mxu0 %v60
  %107 = vmatpush1.msra.mxu0 %v59
  %108 = vmatprep.subr.mxu0 %v62
  %109 = vmatpush1.msra.mxu0 %v61
  %110 = vmatprep.subr.mxu0 %v64
  %111 = vmatpush1.msra.mxu0 %v63
  %112 = vmatprep.subr.mxu0 %v66
  %113 = vmatpush1.msra.mxu0 %v65
  %114 = vmatprep.subr.mxu0 %v90
  %115 = vmatpush1.msra.mxu0 %v87
  %116 = vmatprep.subr.mxu0 0.0
  %117 = vmatpush1.msra.mxu0 0.0
  %118 = vmatprep.subr.mxu0 0.0
  %119 = vmatpush1.msra.mxu0 0.0
  %120 = vmatprep.subr.mxu0 0.0
  %121 = vmatpush1.msra.mxu0 0.0
  %122 = vmatprep.subr.mxu0 0.0
  %123 = vmatpush1.msra.mxu0 0.0
  %124 = vmatprep.subr.mxu0 0.0
  %125 = vmatpush1.msra.mxu0 0.0
  %126 = vmatprep.subr.mxu0 0.0
  %127 = vmatpush1.msra.mxu0 0.0
  %128 = vmatprep.subr.mxu0 0.0
  %129 = vmatpush1.msra.mxu0 0.0
  %130 = vmatprep.subr.mxu0 0.0
  %131 = vmatpush1.msra.mxu0 0.0
  %132 = vmatprep.subr.mxu0 0.0
  %133 = vmatpush1.msra.mxu0 0.0
  %134 = vmatprep.subr.mxu0 0.0
  %135 = vmatpush1.msra.mxu0 0.0
  %136 = vmatprep.subr.mxu0 0.0
  %137 = vmatpush1.msra.mxu0 0.0
  %138 = vmatprep.subr.mxu0 0.0
  %139 = vmatpush1.msra.mxu0 0.0
  %140 = vmatprep.subr.mxu0 0.0
  %141 = vmatpush1.msra.mxu0 0.0
  %142 = vmatprep.subr.mxu0 0.0
  %143 = vmatpush1.msra.mxu0 0.0
  %144 = vmatprep.subr.mxu0 0.0
  %145 = vmatpush1.msra.mxu0 0.0
  %146 = vmatprep.subr.mxu0 0.0
  %147 = vmatpush1.msra.mxu0 0.0
  %148 = vmatprep.subr.mxu0 0.0
  %149 = vmatpush1.msra.mxu0 0.0
  %150 = vmatprep.subr.mxu0 0.0
  %151 = vmatpush1.msra.mxu0 0.0
  %152 = vmatprep.subr.mxu0 0.0
  %153 = vmatpush1.msra.mxu0 0.0
  %154 = vmatprep.subr.mxu0 0.0
  %155 = vmatpush1.msra.mxu0 0.0
  %156 = vmatprep.mubr.f32.mxu0 0.0
  %157 = vmatmul.mubr.f32.gmra.mrb[0].mxu0 %v83
  %v158 = vpop.f32.mrb[0].mxu0
  %v159 = vadd.f32 %v74, %v158
  %v160 = vpop.f32.mrb[0].mxu0
  %v161 = vadd.f32 %v78, %v160
  %162 = vdwg.mxu0
  %v163 = vmax.f32 %v159, 0.0
  %v164 = vmax.f32 %v161, 0.0
  %v165 = vld [vmem:[%s3] sm:$0xff]
  %v166 = vld [vmem:[%s3 + $0x8] sm:$0xff]
  %v167 = vld [vmem:[%s3 + $0x10] sm:$0xff]
  %v168 = vld [vmem:[%s3 + $0x18] sm:$0xff]
  %v169 = vld [vmem:[%s3 + $0x20] sm:$0xff]
  %v170 = vld [vmem:[%s3 + $0x28] sm:$0xff]
  %v171 = vld [vmem:[%s3 + $0x30] sm:$0xff]
  %v172 = vld [vmem:[%s3 + $0x38] sm:$0xff]
  %v173 = vld [vmem:[%s3 + $0x40] sm:$0xff]
  %v174 = vld [vmem:[%s3 + $0x48] sm:$0xff]
  %v175 = vld [vmem:[%s3 + $0x50] sm:$0xff]
  %v176 = vld [vmem:[%s3 + $0x58] sm:$0xff]
  %v177 = vld [vmem:[%s3 + $0x60] sm:$0xff]
  %v178 = vld [vmem:[%s3 + $0x68] sm:$0xff]
  %v179 = vld [vmem:[%s3 + $0x70] sm:$0xff]
  %v180 = vld [vmem:[%s3 + $0x78] sm:$0xff]
  %v181 = vld [vmem:[%s3 + $0x80] sm:$0xff]
  %v182 = vld [vmem:[%s3 + $0x88] sm:$0xff]
  %v183 = vld [vmem:[%s3 + $0x90] sm:$0xff]
  %v184 = vld [vmem:[%s3 + $0x98] sm:$0xff]
  %v185 = vld [vmem:[%s3 + $0xa0] sm:$0xff]
  %v186 = vld [vmem:[%s3 + $0xa8] sm:$0xff]
  %v187 = vld [vmem:[%s3 + $0xb0] sm:$0xff]
  %v188 = vld [vmem:[%s3 + $0xb8] sm:$0xff]
  %v189 = vld [vmem:[%s3 + $0xc0] sm:$0xff]
  %v190 = vld [vmem:[%s3 + $0xc8] sm:$0xff]
  %v191 = vld [vmem:[%s3 + $0xd0] sm:$0xff]
  %v192 = vld [vmem:[%s3 + $0xd8] sm:$0xff]
  %v193 = vld [vmem:[%s3 + $0xe0] sm:$0xff]
  %v194 = vld [vmem:[%s3 + $0xe8] sm:$0xff]
  %v195 = vld [vmem:[%s3 + $0xf0] sm:$0xff]
  %v196 = vld [vmem:[%s3 + $0xf8] sm:$0xff]
  %v197 = vld [vmem:[%s3 + $0x100] sm:$0xff]
  %v198 = vld [vmem:[%s3 + $0x108] sm:$0xff]
  %v199 = vld [vmem:[%s3 + $0x110] sm:$0xff]
  %v200 = vld [vmem:[%s3 + $0x118] sm:$0xff]
  %v201 = vld [vmem:[%s3 + $0x120] sm:$0xff]
  %v202 = vld [vmem:[%s3 + $0x128] sm:$0xff]
  %v203 = vld [vmem:[%s3 + $0x130] sm:$0xff]
  %v204 = vld [vmem:[%s3 + $0x138] sm:$0xff]
  %v205 = vld [vmem:[%s3 + $0x140] sm:$0xff]
  %v206 = vld [vmem:[%s3 + $0x148] sm:$0xff]
  %v207 = vld [vmem:[%s3 + $0x150] sm:$0xff]
  %v208 = vld [vmem:[%s3 + $0x158] sm:$0xff]
  %v209 = vld [vmem:[%s3 + $0x160] sm:$0xff]
  %v210 = vld [vmem:[%s3 + $0x168] sm:$0xff]
  %v211 = vld [vmem:[%s3 + $0x170] sm:$0xff]
  %v212 = vld [vmem:[%s3 + $0x178] sm:$0xff]
  %v213 = vld [vmem:[%s3 + $0x180] sm:$0xff]
  %v214 = vld [vmem:[%s3 + $0x188] sm:$0xff]
  %v215 = vld [vmem:[%s3 + $0x190] sm:$0xff]
  %v216 = vld [vmem:[%s3 + $0x198] sm:$0xff]
  %v217 = vld [vmem:[%s3 + $0x1a0] sm:$0xff]
  %v218 = vld [vmem:[%s3 + $0x1a8] sm:$0xff]
  %v219 = vld [vmem:[%s3 + $0x1b0] sm:$0xff]
  %v220 = vld [vmem:[%s3 + $0x1b8] sm:$0xff]
  %v221 = vld [vmem:[%s3 + $0x1c0] sm:$0xff]
  %v222 = vld [vmem:[%s3 + $0x1c8] sm:$0xff]
  %v223 = vld [vmem:[%s3 + $0x1d0] sm:$0xff]
  %v224 = vld [vmem:[%s3 + $0x1d8] sm:$0xff]
  %v225 = vld [vmem:[%s3 + $0x1e0] sm:$0xff]
  %v226 = vld [vmem:[%s3 + $0x1e8] sm:$0xff]
  %v227 = vld [vmem:[%s3 + $0x1f0] sm:$0xff]
  %v228 = vld [vmem:[%s3 + $0x1f8] sm:$0xff]
  %s229 = scalar_lea.vmem %s12, 1
  %v230 = vld [vmem:[%s229] ss:$8 sm:$0x3]
  %v232 = vlaneseq
  %v233 = vshrl.u32 %v232, 7
  %v234 = vsub.s32 0, %v233
  %v235 = vrot.slane %v230, %v234
  %v236 = vlaneseq
  %v237 = vshrl.u32 %v236, 7
  %v238 = vsub.s32 1, %v237
  %v239 = vrot.slane %v230, %v238
  %242 = vmatprep.subr.mxu0 %v166
  %243 = vmatpush1.msra.mxu0 %v165
  %244 = vmatprep.subr.mxu0 %v168
  %245 = vmatpush1.msra.mxu0 %v167
  %246 = vmatprep.subr.mxu0 %v170
  %247 = vmatpush1.msra.mxu0 %v169
  %248 = vmatprep.subr.mxu0 %v172
  %249 = vmatpush1.msra.mxu0 %v171
  %250 = vmatprep.subr.mxu0 %v174
  %251 = vmatpush1.msra.mxu0 %v173
  %252 = vmatprep.subr.mxu0 %v176
  %253 = vmatpush1.msra.mxu0 %v175
  %254 = vmatprep.subr.mxu0 %v178
  %255 = vmatpush1.msra.mxu0 %v177
  %256 = vmatprep.subr.mxu0 %v180
  %257 = vmatpush1.msra.mxu0 %v179
  %258 = vmatprep.subr.mxu0 %v182
  %259 = vmatpush1.msra.mxu0 %v181
  %260 = vmatprep.subr.mxu0 %v184
  %261 = vmatpush1.msra.mxu0 %v183
  %262 = vmatprep.subr.mxu0 %v186
  %263 = vmatpush1.msra.mxu0 %v185
  %264 = vmatprep.subr.mxu0 %v188
  %265 = vmatpush1.msra.mxu0 %v187
  %266 = vmatprep.subr.mxu0 %v190
  %267 = vmatpush1.msra.mxu0 %v189
  %268 = vmatprep.subr.mxu0 %v192
  %269 = vmatpush1.msra.mxu0 %v191
  %270 = vmatprep.subr.mxu0 %v194
  %271 = vmatpush1.msra.mxu0 %v193
  %272 = vmatprep.subr.mxu0 %v196
  %273 = vmatpush1.msra.mxu0 %v195
  %274 = vmatprep.subr.mxu0 %v198
  %275 = vmatpush1.msra.mxu0 %v197
  %276 = vmatprep.subr.mxu0 %v200
  %277 = vmatpush1.msra.mxu0 %v199
  %278 = vmatprep.subr.mxu0 %v202
  %279 = vmatpush1.msra.mxu0 %v201
  %280 = vmatprep.subr.mxu0 %v204
  %281 = vmatpush1.msra.mxu0 %v203
  %282 = vmatprep.subr.mxu0 %v206
  %283 = vmatpush1.msra.mxu0 %v205
  %284 = vmatprep.subr.mxu0 %v208
  %285 = vmatpush1.msra.mxu0 %v207
  %286 = vmatprep.subr.mxu0 %v210
  %287 = vmatpush1.msra.mxu0 %v209
  %288 = vmatprep.subr.mxu0 %v212
  %289 = vmatpush1.msra.mxu0 %v211
  %290 = vmatprep.subr.mxu0 %v214
  %291 = vmatpush1.msra.mxu0 %v213
  %292 = vmatprep.subr.mxu0 %v216
  %293 = vmatpush1.msra.mxu0 %v215
  %294 = vmatprep.subr.mxu0 %v218
  %295 = vmatpush1.msra.mxu0 %v217
  %296 = vmatprep.subr.mxu0 %v220
  %297 = vmatpush1.msra.mxu0 %v219
  %298 = vmatprep.subr.mxu0 %v222
  %299 = vmatpush1.msra.mxu0 %v221
  %300 = vmatprep.subr.mxu0 %v224
  %301 = vmatpush1.msra.mxu0 %v223
  %302 = vmatprep.subr.mxu0 %v226
  %303 = vmatpush1.msra.mxu0 %v225
  %304 = vmatprep.subr.mxu0 %v228
  %305 = vmatpush1.msra.mxu0 %v227
  %306 = vmatprep.mubr.f32.mxu0 %v164
  %307 = vmatmul.mubr.f32.gmra.mrb[0].mxu0 %v163
  %v308 = vpop.f32.mrb[0].mxu0
  %v309 = vadd.f32 %v235, %v308
  %v310 = vpop.f32.mrb[0].mxu0
  %v311 = vadd.f32 %v239, %v310
  %312 = vdwg.mxu0
  %v313 = vmax.f32 %v309, 0.0
  %v314 = vmax.f32 %v311, 0.0
  %v315 = vld [vmem:[%s4] sm:$0xff]
  %v316 = vld [vmem:[%s4 + $0x8] sm:$0xff]
  %v317 = vld [vmem:[%s4 + $0x10] sm:$0xff]
  %v318 = vld [vmem:[%s4 + $0x18] sm:$0xff]
  %v319 = vld [vmem:[%s4 + $0x20] sm:$0xff]
  %v320 = vld [vmem:[%s4 + $0x28] sm:$0xff]
  %v321 = vld [vmem:[%s4 + $0x30] sm:$0xff]
  %v322 = vld [vmem:[%s4 + $0x38] sm:$0xff]
  %v323 = vld [vmem:[%s4 + $0x40] sm:$0xff]
  %v324 = vld [vmem:[%s4 + $0x48] sm:$0xff]
  %v325 = vld [vmem:[%s4 + $0x50] sm:$0xff]
  %v326 = vld [vmem:[%s4 + $0x58] sm:$0xff]
  %v327 = vld [vmem:[%s4 + $0x60] sm:$0xff]
  %v328 = vld [vmem:[%s4 + $0x68] sm:$0xff]
  %v329 = vld [vmem:[%s4 + $0x70] sm:$0xff]
  %v330 = vld [vmem:[%s4 + $0x78] sm:$0xff]
  %v331 = vld [vmem:[%s4 + $0x80] sm:$0xff]
  %v332 = vld [vmem:[%s4 + $0x88] sm:$0xff]
  %v333 = vld [vmem:[%s4 + $0x90] sm:$0xff]
  %v334 = vld [vmem:[%s4 + $0x98] sm:$0xff]
  %v335 = vld [vmem:[%s4 + $0xa0] sm:$0xff]
  %v336 = vld [vmem:[%s4 + $0xa8] sm:$0xff]
  %v337 = vld [vmem:[%s4 + $0xb0] sm:$0xff]
  %v338 = vld [vmem:[%s4 + $0xb8] sm:$0xff]
  %v339 = vld [vmem:[%s4 + $0xc0] sm:$0xff]
  %v340 = vld [vmem:[%s4 + $0xc8] sm:$0xff]
  %v341 = vld [vmem:[%s4 + $0xd0] sm:$0xff]
  %v342 = vld [vmem:[%s4 + $0xd8] sm:$0xff]
  %v343 = vld [vmem:[%s4 + $0xe0] sm:$0xff]
  %v344 = vld [vmem:[%s4 + $0xe8] sm:$0xff]
  %v345 = vld [vmem:[%s4 + $0xf0] sm:$0xff]
  %v346 = vld [vmem:[%s4 + $0xf8] sm:$0xff]
  %v347 = vld [vmem:[%s12 + $0x2] ss:$0 sm:$0xff]
  %348 = vmatprep.subr.mxu0 0.0
  %349 = vmatpush1.msra.mxu0 %v315
  %350 = vmatprep.subr.mxu0 0.0
  %351 = vmatpush1.msra.mxu0 %v316
  %352 = vmatprep.subr.mxu0 0.0
  %353 = vmatpush1.msra.mxu0 %v317
  %354 = vmatprep.subr.mxu0 0.0
  %355 = vmatpush1.msra.mxu0 %v318
  %356 = vmatprep.subr.mxu0 0.0
  %357 = vmatpush1.msra.mxu0 %v319
  %358 = vmatprep.subr.mxu0 0.0
  %359 = vmatpush1.msra.mxu0 %v320
  %360 = vmatprep.subr.mxu0 0.0
  %361 = vmatpush1.msra.mxu0 %v321
  %362 = vmatprep.subr.mxu0 0.0
  %363 = vmatpush1.msra.mxu0 %v322
  %364 = vmatprep.subr.mxu0 0.0
  %365 = vmatpush1.msra.mxu0 %v323
  %366 = vmatprep.subr.mxu0 0.0
  %367 = vmatpush1.msra.mxu0 %v324
  %368 = vmatprep.subr.mxu0 0.0
  %369 = vmatpush1.msra.mxu0 %v325
  %370 = vmatprep.subr.mxu0 0.0
  %371 = vmatpush1.msra.mxu0 %v326
  %372 = vmatprep.subr.mxu0 0.0
  %373 = vmatpush1.msra.mxu0 %v327
  %374 = vmatprep.subr.mxu0 0.0
  %375 = vmatpush1.msra.mxu0 %v328
  %376 = vmatprep.subr.mxu0 0.0
  %377 = vmatpush1.msra.mxu0 %v329
  %378 = vmatprep.subr.mxu0 0.0
  %379 = vmatpush1.msra.mxu0 %v330
  %380 = vmatprep.subr.mxu0 0.0
  %381 = vmatpush1.msra.mxu0 %v331
  %382 = vmatprep.subr.mxu0 0.0
  %383 = vmatpush1.msra.mxu0 %v332
  %384 = vmatprep.subr.mxu0 0.0
  %385 = vmatpush1.msra.mxu0 %v333
  %386 = vmatprep.subr.mxu0 0.0
  %387 = vmatpush1.msra.mxu0 %v334
  %388 = vmatprep.subr.mxu0 0.0
  %389 = vmatpush1.msra.mxu0 %v335
  %390 = vmatprep.subr.mxu0 0.0
  %391 = vmatpush1.msra.mxu0 %v336
  %392 = vmatprep.subr.mxu0 0.0
  %393 = vmatpush1.msra.mxu0 %v337
  %394 = vmatprep.subr.mxu0 0.0
  %395 = vmatpush1.msra.mxu0 %v338
  %396 = vmatprep.subr.mxu0 0.0
  %397 = vmatpush1.msra.mxu0 %v339
  %398 = vmatprep.subr.mxu0 0.0
  %399 = vmatpush1.msra.mxu0 %v340
  %400 = vmatprep.subr.mxu0 0.0
  %401 = vmatpush1.msra.mxu0 %v341
  %402 = vmatprep.subr.mxu0 0.0
  %403 = vmatpush1.msra.mxu0 %v342
  %404 = vmatprep.subr.mxu0 0.0
  %405 = vmatpush1.msra.mxu0 %v343
  %406 = vmatprep.subr.mxu0 0.0
  %407 = vmatpush1.msra.mxu0 %v344
  %408 = vmatprep.subr.mxu0 0.0
  %409 = vmatpush1.msra.mxu0 %v345
  %410 = vmatprep.subr.mxu0 0.0
  %411 = vmatpush1.msra.mxu0 %v346
  %412 = vmatprep.mubr.f32.mxu0 %v314
  %413 = vmatmul.mubr.f32.gmra.mrb[0].mxu0 %v313
  %v414 = vpop.f32.mrb[0].mxu0
  %v415 = vadd.f32 %v347, %v414
  %v416 = vpop.f32.mrb[0].mxu0
  %417 = vdwg.mxu0
  %v418 = vadd.f32 %v415, %v44
  %v419 = vld [vmem:[%s12 + $0x3] ss:$0 sm:$0xff]
  %v420 = vmul.f32 %v418, %v419
  %v421 = vld [vmem:[%s12 + $0x4] ss:$0 sm:$0xff]
  %v422 = vadd.f32 %v420, %v421
  %v423 = vld [vmem:[%s5] sm:$0xff]
  %v424 = vld [vmem:[%s5 + $0x8] sm:$0xff]
  %v425 = vld [vmem:[%s5 + $0x10] sm:$0xff]
  %v426 = vld [vmem:[%s5 + $0x18] sm:$0xff]
  %v427 = vld [vmem:[%s5 + $0x20] sm:$0xff]
  %v428 = vld [vmem:[%s5 + $0x28] sm:$0xff]
  %v429 = vld [vmem:[%s5 + $0x30] sm:$0xff]
  %v430 = vld [vmem:[%s5 + $0x38] sm:$0xff]
  %v431 = vld [vmem:[%s5 + $0x40] sm:$0xff]
  %v432 = vld [vmem:[%s5 + $0x48] sm:$0xff]
  %v433 = vld [vmem:[%s5 + $0x50] sm:$0xff]
  %v434 = vld [vmem:[%s5 + $0x58] sm:$0xff]
  %v435 = vld [vmem:[%s5 + $0x60] sm:$0xff]
  %v436 = vld [vmem:[%s5 + $0x68] sm:$0xff]
  %v437 = vld [vmem:[%s5 + $0x70] sm:$0xff]
  %v438 = vld [vmem:[%s5 + $0x78] sm:$0xff]
  %v439 = vld [vmem:[%s5 + $0x80] sm:$0xff]
  %v440 = vld [vmem:[%s5 + $0x88] sm:$0xff]
  %v441 = vld [vmem:[%s5 + $0x90] sm:$0xff]
  %v442 = vld [vmem:[%s5 + $0x98] sm:$0xff]
  %v443 = vld [vmem:[%s5 + $0xa0] sm:$0xff]
  %v444 = vld [vmem:[%s5 + $0xa8] sm:$0xff]
  %v445 = vld [vmem:[%s5 + $0xb0] sm:$0x3]
  %v446 = vld [vmem:[%s5 + $0xb8] sm:$0x3]
  %s447 = scalar_lea.vmem %s12, 5
  %v448 = vld [vmem:[%s447] ss:$8 sm:$0x3]
  %v450 = vlaneseq
  %v451 = vshrl.u32 %v450, 7
  %v452 = vsub.s32 0, %v451
  %v453 = vrot.slane %v448, %v452
  %v454 = vlaneseq
  %v455 = vshrl.u32 %v454, 7
  %v456 = vsub.s32 1, %v455
  %v457 = vrot.slane %v448, %v456
  %v461 = vsel %vm81, %v422, 0
  %v464 = vsel %vm85, %v445, 0
  %v467 = vsel %vm85, %v446, 0
  %469 = vmatprep.subr.mxu0 %v424
  %470 = vmatpush1.msra.mxu0 %v423
  %471 = vmatprep.subr.mxu0 %v426
  %472 = vmatpush1.msra.mxu0 %v425
  %473 = vmatprep.subr.mxu0 %v428
  %474 = vmatpush1.msra.mxu0 %v427
  %475 = vmatprep.subr.mxu0 %v430
  %476 = vmatpush1.msra.mxu0 %v429
  %477 = vmatprep.subr.mxu0 %v432
  %478 = vmatpush1.msra.mxu0 %v431
  %479 = vmatprep.subr.mxu0 %v434
  %480 = vmatpush1.msra.mxu0 %v433
  %481 = vmatprep.subr.mxu0 %v436
  %482 = vmatpush1.msra.mxu0 %v435
  %483 = vmatprep.subr.mxu0 %v438
  %484 = vmatpush1.msra.mxu0 %v437
  %485 = vmatprep.subr.mxu0 %v440
  %486 = vmatpush1.msra.mxu0 %v439
  %487 = vmatprep.subr.mxu0 %v442
  %488 = vmatpush1.msra.mxu0 %v441
  %489 = vmatprep.subr.mxu0 %v444
  %490 = vmatpush1.msra.mxu0 %v443
  %491 = vmatprep.subr.mxu0 %v467
  %492 = vmatpush1.msra.mxu0 %v464
  %493 = vmatprep.subr.mxu0 0.0
  %494 = vmatpush1.msra.mxu0 0.0
  %495 = vmatprep.subr.mxu0 0.0
  %496 = vmatpush1.msra.mxu0 0.0
  %497 = vmatprep.subr.mxu0 0.0
  %498 = vmatpush1.msra.mxu0 0.0
  %499 = vmatprep.subr.mxu0 0.0
  %500 = vmatpush1.msra.mxu0 0.0
  %501 = vmatprep.subr.mxu0 0.0
  %502 = vmatpush1.msra.mxu0 0.0
  %503 = vmatprep.subr.mxu0 0.0
  %504 = vmatpush1.msra.mxu0 0.0
  %505 = vmatprep.subr.mxu0 0.0
  %506 = vmatpush1.msra.mxu0 0.0
  %507 = vmatprep.subr.mxu0 0.0
  %508 = vmatpush1.msra.mxu0 0.0
  %509 = vmatprep.subr.mxu0 0.0
  %510 = vmatpush1.msra.mxu0 0.0
  %511 = vmatprep.subr.mxu0 0.0
  %512 = vmatpush1.msra.mxu0 0.0
  %513 = vmatprep.subr.mxu0 0.0
  %514 = vmatpush1.msra.mxu0 0.0
  %515 = vmatprep.subr.mxu0 0.0
  %516 = vmatpush1.msra.mxu0 0.0
  %517 = vmatprep.subr.mxu0 0.0
  %518 = vmatpush1.msra.mxu0 0.0
  %519 = vmatprep.subr.mxu0 0.0
  %520 = vmatpush1.msra.mxu0 0.0
  %521 = vmatprep.subr.mxu0 0.0
  %522 = vmatpush1.msra.mxu0 0.0
  %523 = vmatprep.subr.mxu0 0.0
  %524 = vmatpush1.msra.mxu0 0.0
  %525 = vmatprep.subr.mxu0 0.0
  %526 = vmatpush1.msra.mxu0 0.0
  %527 = vmatprep.subr.mxu0 0.0
  %528 = vmatpush1.msra.mxu0 0.0
  %529 = vmatprep.subr.mxu0 0.0
  %530 = vmatpush1.msra.mxu0 0.0
  %531 = vmatprep.subr.mxu0 0.0
  %532 = vmatpush1.msra.mxu0 0.0
  %533 = vmatprep.mubr.f32.mxu0 0.0
  %534 = vmatmul.mubr.f32.gmra.mrb[0].mxu0 %v461
  %v535 = vpop.f32.mrb[0].mxu0
  %v536 = vadd.f32 %v453, %v535
  %v537 = vpop.f32.mrb[0].mxu0
  %v538 = vadd.f32 %v457, %v537
  %539 = vdwg.mxu0
  %v540 = vmax.f32 %v536, 0.0
  %v541 = vmax.f32 %v538, 0.0
  %v542 = vld [vmem:[%s6] sm:$0xff]
  %v543 = vld [vmem:[%s6 + $0x8] sm:$0xff]
  %v544 = vld [vmem:[%s6 + $0x10] sm:$0xff]
  %v545 = vld [vmem:[%s6 + $0x18] sm:$0xff]
  %v546 = vld [vmem:[%s6 + $0x20] sm:$0xff]
  %v547 = vld [vmem:[%s6 + $0x28] sm:$0xff]
  %v548 = vld [vmem:[%s6 + $0x30] sm:$0xff]
  %v549 = vld [vmem:[%s6 + $0x38] sm:$0xff]
  %v550 = vld [vmem:[%s6 + $0x40] sm:$0xff]
  %v551 = vld [vmem:[%s6 + $0x48] sm:$0xff]
  %v552 = vld [vmem:[%s6 + $0x50] sm:$0xff]
  %v553 = vld [vmem:[%s6 + $0x58] sm:$0xff]
  %v554 = vld [vmem:[%s6 + $0x60] sm:$0xff]
  %v555 = vld [vmem:[%s6 + $0x68] sm:$0xff]
  %v556 = vld [vmem:[%s6 + $0x70] sm:$0xff]
  %v557 = vld [vmem:[%s6 + $0x78] sm:$0xff]
  %v558 = vld [vmem:[%s6 + $0x80] sm:$0xff]
  %v559 = vld [vmem:[%s6 + $0x88] sm:$0xff]
  %v560 = vld [vmem:[%s6 + $0x90] sm:$0xff]
  %v561 = vld [vmem:[%s6 + $0x98] sm:$0xff]
  %v562 = vld [vmem:[%s6 + $0xa0] sm:$0xff]
  %v563 = vld [vmem:[%s6 + $0xa8] sm:$0xff]
  %v564 = vld [vmem:[%s6 + $0xb0] sm:$0xff]
  %v565 = vld [vmem:[%s6 + $0xb8] sm:$0xff]
  %v566 = vld [vmem:[%s6 + $0xc0] sm:$0xff]
  %v567 = vld [vmem:[%s6 + $0xc8] sm:$0xff]
  %v568 = vld [vmem:[%s6 + $0xd0] sm:$0xff]
  %v569 = vld [vmem:[%s6 + $0xd8] sm:$0xff]
  %v570 = vld [vmem:[%s6 + $0xe0] sm:$0xff]
  %v571 = vld [vmem:[%s6 + $0xe8] sm:$0xff]
  %v572 = vld [vmem:[%s6 + $0xf0] sm:$0xff]
  %v573 = vld [vmem:[%s6 + $0xf8] sm:$0xff]
  %v574 = vld [vmem:[%s6 + $0x100] sm:$0xff]
  %v575 = vld [vmem:[%s6 + $0x108] sm:$0xff]
  %v576 = vld [vmem:[%s6 + $0x110] sm:$0xff]
  %v577 = vld [vmem:[%s6 + $0x118] sm:$0xff]
  %v578 = vld [vmem:[%s6 + $0x120] sm:$0xff]
  %v579 = vld [vmem:[%s6 + $0x128] sm:$0xff]
  %v580 = vld [vmem:[%s6 + $0x130] sm:$0xff]
  %v581 = vld [vmem:[%s6 + $0x138] sm:$0xff]
  %v582 = vld [vmem:[%s6 + $0x140] sm:$0xff]
  %v583 = vld [vmem:[%s6 + $0x148] sm:$0xff]
  %v584 = vld [vmem:[%s6 + $0x150] sm:$0xff]
  %v585 = vld [vmem:[%s6 + $0x158] sm:$0xff]
  %v586 = vld [vmem:[%s6 + $0x160] sm:$0xff]
  %v587 = vld [vmem:[%s6 + $0x168] sm:$0xff]
  %v588 = vld [vmem:[%s6 + $0x170] sm:$0xff]
  %v589 = vld [vmem:[%s6 + $0x178] sm:$0xff]
  %v590 = vld [vmem:[%s6 + $0x180] sm:$0xff]
  %v591 = vld [vmem:[%s6 + $0x188] sm:$0xff]
  %v592 = vld [vmem:[%s6 + $0x190] sm:$0xff]
  %v593 = vld [vmem:[%s6 + $0x198] sm:$0xff]
  %v594 = vld [vmem:[%s6 + $0x1a0] sm:$0xff]
  %v595 = vld [vmem:[%s6 + $0x1a8] sm:$0xff]
  %v596 = vld [vmem:[%s6 + $0x1b0] sm:$0xff]
  %v597 = vld [vmem:[%s6 + $0x1b8] sm:$0xff]
  %v598 = vld [vmem:[%s6 + $0x1c0] sm:$0xff]
  %v599 = vld [vmem:[%s6 + $0x1c8] sm:$0xff]
  %v600 = vld [vmem:[%s6 + $0x1d0] sm:$0xff]
  %v601 = vld [vmem:[%s6 + $0x1d8] sm:$0xff]
  %v602 = vld [vmem:[%s6 + $0x1e0] sm:$0xff]
  %v603 = vld [vmem:[%s6 + $0x1e8] sm:$0xff]
  %v604 = vld [vmem:[%s6 + $0x1f0] sm:$0xff]
  %v605 = vld [vmem:[%s6 + $0x1f8] sm:$0xff]
  %s606 = scalar_lea.vmem %s12, 6
  %v607 = vld [vmem:[%s606] ss:$8 sm:$0x3]
  %v609 = vlaneseq
  %v610 = vshrl.u32 %v609, 7
  %v611 = vsub.s32 0, %v610
  %v612 = vrot.slane %v607, %v611
  %v613 = vlaneseq
  %v614 = vshrl.u32 %v613, 7
  %v615 = vsub.s32 1, %v614
  %v616 = vrot.slane %v607, %v615
  %619 = vmatprep.subr.mxu0 %v543
  %620 = vmatpush1.msra.mxu0 %v542
  %621 = vmatprep.subr.mxu0 %v545
  %622 = vmatpush1.msra.mxu0 %v544
  %623 = vmatprep.subr.mxu0 %v547
  %624 = vmatpush1.msra.mxu0 %v546
  %625 = vmatprep.subr.mxu0 %v549
  %626 = vmatpush1.msra.mxu0 %v548
  %627 = vmatprep.subr.mxu0 %v551
  %628 = vmatpush1.msra.mxu0 %v550
  %629 = vmatprep.subr.mxu0 %v553
  %630 = vmatpush1.msra.mxu0 %v552
  %631 = vmatprep.subr.mxu0 %v555
  %632 = vmatpush1.msra.mxu0 %v554
  %633 = vmatprep.subr.mxu0 %v557
  %634 = vmatpush1.msra.mxu0 %v556
  %635 = vmatprep.subr.mxu0 %v559
  %636 = vmatpush1.msra.mxu0 %v558
  %637 = vmatprep.subr.mxu0 %v561
  %638 = vmatpush1.msra.mxu0 %v560
  %639 = vmatprep.subr.mxu0 %v563
  %640 = vmatpush1.msra.mxu0 %v562
  %641 = vmatprep.subr.mxu0 %v565
  %642 = vmatpush1.msra.mxu0 %v564
  %643 = vmatprep.subr.mxu0 %v567
  %644 = vmatpush1.msra.mxu0 %v566
  %645 = vmatprep.subr.mxu0 %v569
  %646 = vmatpush1.msra.mxu0 %v568
  %647 = vmatprep.subr.mxu0 %v571
  %648 = vmatpush1.msra.mxu0 %v570
  %649 = vmatprep.subr.mxu0 %v573
  %650 = vmatpush1.msra.mxu0 %v572
  %651 = vmatprep.subr.mxu0 %v575
  %652 = vmatpush1.msra.mxu0 %v574
  %653 = vmatprep.subr.mxu0 %v577
  %654 = vmatpush1.msra.mxu0 %v576
  %655 = vmatprep.subr.mxu0 %v579
  %656 = vmatpush1.msra.mxu0 %v578
  %657 = vmatprep.subr.mxu0 %v581
  %658 = vmatpush1.msra.mxu0 %v580
  %659 = vmatprep.subr.mxu0 %v583
  %660 = vmatpush1.msra.mxu0 %v582
  %661 = vmatprep.subr.mxu0 %v585
  %662 = vmatpush1.msra.mxu0 %v584
  %663 = vmatprep.subr.mxu0 %v587
  %664 = vmatpush1.msra.mxu0 %v586
  %665 = vmatprep.subr.mxu0 %v589
  %666 = vmatpush1.msra.mxu0 %v588
  %667 = vmatprep.subr.mxu0 %v591
  %668 = vmatpush1.msra.mxu0 %v590
  %669 = vmatprep.subr.mxu0 %v593
  %670 = vmatpush1.msra.mxu0 %v592
  %671 = vmatprep.subr.mxu0 %v595
  %672 = vmatpush1.msra.mxu0 %v594
  %673 = vmatprep.subr.mxu0 %v597
  %674 = vmatpush1.msra.mxu0 %v596
  %675 = vmatprep.subr.mxu0 %v599
  %676 = vmatpush1.msra.mxu0 %v598
  %677 = vmatprep.subr.mxu0 %v601
  %678 = vmatpush1.msra.mxu0 %v600
  %679 = vmatprep.subr.mxu0 %v603
  %680 = vmatpush1.msra.mxu0 %v602
  %681 = vmatprep.subr.mxu0 %v605
  %682 = vmatpush1.msra.mxu0 %v604
  %683 = vmatprep.mubr.f32.mxu0 %v541
  %684 = vmatmul.mubr.f32.gmra.mrb[0].mxu0 %v540
  %v685 = vpop.f32.mrb[0].mxu0
  %v686 = vadd.f32 %v612, %v685
  %v687 = vpop.f32.mrb[0].mxu0
  %v688 = vadd.f32 %v616, %v687
  %689 = vdwg.mxu0
  %v690 = vmax.f32 %v686, 0.0
  %v691 = vmax.f32 %v688, 0.0
  %v692 = vld [vmem:[%s7] sm:$0xff]
  %v693 = vld [vmem:[%s7 + $0x8] sm:$0xff]
  %v694 = vld [vmem:[%s7 + $0x10] sm:$0xff]
  %v695 = vld [vmem:[%s7 + $0x18] sm:$0xff]
  %v696 = vld [vmem:[%s7 + $0x20] sm:$0xff]
  %v697 = vld [vmem:[%s7 + $0x28] sm:$0xff]
  %v698 = vld [vmem:[%s7 + $0x30] sm:$0xff]
  %v699 = vld [vmem:[%s7 + $0x38] sm:$0xff]
  %v700 = vld [vmem:[%s7 + $0x40] sm:$0xff]
  %v701 = vld [vmem:[%s7 + $0x48] sm:$0xff]
  %v702 = vld [vmem:[%s7 + $0x50] sm:$0xff]
  %v703 = vld [vmem:[%s7 + $0x58] sm:$0xff]
  %v704 = vld [vmem:[%s7 + $0x60] sm:$0xff]
  %v705 = vld [vmem:[%s7 + $0x68] sm:$0xff]
  %v706 = vld [vmem:[%s7 + $0x70] sm:$0xff]
  %v707 = vld [vmem:[%s7 + $0x78] sm:$0xff]
  %v708 = vld [vmem:[%s7 + $0x80] sm:$0xff]
  %v709 = vld [vmem:[%s7 + $0x88] sm:$0xff]
  %v710 = vld [vmem:[%s7 + $0x90] sm:$0xff]
  %v711 = vld [vmem:[%s7 + $0x98] sm:$0xff]
  %v712 = vld [vmem:[%s7 + $0xa0] sm:$0xff]
  %v713 = vld [vmem:[%s7 + $0xa8] sm:$0xff]
  %v714 = vld [vmem:[%s7 + $0xb0] sm:$0xff]
  %v715 = vld [vmem:[%s7 + $0xb8] sm:$0xff]
  %v716 = vld [vmem:[%s7 + $0xc0] sm:$0xff]
  %v717 = vld [vmem:[%s7 + $0xc8] sm:$0xff]
  %v718 = vld [vmem:[%s7 + $0xd0] sm:$0xff]
  %v719 = vld [vmem:[%s7 + $0xd8] sm:$0xff]
  %v720 = vld [vmem:[%s7 + $0xe0] sm:$0xff]
  %v721 = vld [vmem:[%s7 + $0xe8] sm:$0xff]
  %v722 = vld [vmem:[%s7 + $0xf0] sm:$0xff]
  %v723 = vld [vmem:[%s7 + $0xf8] sm:$0xff]
  %v724 = vld [vmem:[%s7 + $0x100] sm:$0xff]
  %v725 = vld [vmem:[%s7 + $0x108] sm:$0xff]
  %v726 = vld [vmem:[%s7 + $0x110] sm:$0xff]
  %v727 = vld [vmem:[%s7 + $0x118] sm:$0xff]
  %v728 = vld [vmem:[%s7 + $0x120] sm:$0xff]
  %v729 = vld [vmem:[%s7 + $0x128] sm:$0xff]
  %v730 = vld [vmem:[%s7 + $0x130] sm:$0xff]
  %v731 = vld [vmem:[%s7 + $0x138] sm:$0xff]
  %v732 = vld [vmem:[%s7 + $0x140] sm:$0xff]
  %v733 = vld [vmem:[%s7 + $0x148] sm:$0xff]
  %v734 = vld [vmem:[%s7 + $0x150] sm:$0xff]
  %v735 = vld [vmem:[%s7 + $0x158] sm:$0xff]
  %v736 = vld [vmem:[%s7 + $0x160] sm:$0xff]
  %v737 = vld [vmem:[%s7 + $0x168] sm:$0xff]
  %v738 = vld [vmem:[%s7 + $0x170] sm:$0xff]
  %v739 = vld [vmem:[%s7 + $0x178] sm:$0xff]
  %v740 = vld [vmem:[%s7 + $0x180] sm:$0xff]
  %v741 = vld [vmem:[%s7 + $0x188] sm:$0xff]
  %v742 = vld [vmem:[%s7 + $0x190] sm:$0xff]
  %v743 = vld [vmem:[%s7 + $0x198] sm:$0xff]
  %v744 = vld [vmem:[%s7 + $0x1a0] sm:$0xff]
  %v745 = vld [vmem:[%s7 + $0x1a8] sm:$0xff]
  %v746 = vld [vmem:[%s7 + $0x1b0] sm:$0xff]
  %v747 = vld [vmem:[%s7 + $0x1b8] sm:$0xff]
  %v748 = vld [vmem:[%s7 + $0x1c0] sm:$0xff]
  %v749 = vld [vmem:[%s7 + $0x1c8] sm:$0xff]
  %v750 = vld [vmem:[%s7 + $0x1d0] sm:$0xff]
  %v751 = vld [vmem:[%s7 + $0x1d8] sm:$0xff]
  %v752 = vld [vmem:[%s7 + $0x1e0] sm:$0xff]
  %v753 = vld [vmem:[%s7 + $0x1e8] sm:$0xff]
  %v754 = vld [vmem:[%s7 + $0x1f0] sm:$0xff]
  %v755 = vld [vmem:[%s7 + $0x1f8] sm:$0xff]
  %v756 = vld [vmem:[%s7 + $0x200] sm:$0xff]
  %v757 = vld [vmem:[%s7 + $0x208] sm:$0xff]
  %v758 = vld [vmem:[%s7 + $0x210] sm:$0xff]
  %v759 = vld [vmem:[%s7 + $0x218] sm:$0xff]
  %v760 = vld [vmem:[%s7 + $0x220] sm:$0xff]
  %v761 = vld [vmem:[%s7 + $0x228] sm:$0xff]
  %v762 = vld [vmem:[%s7 + $0x230] sm:$0xff]
  %v763 = vld [vmem:[%s7 + $0x238] sm:$0xff]
  %v764 = vld [vmem:[%s7 + $0x240] sm:$0xff]
  %v765 = vld [vmem:[%s7 + $0x248] sm:$0xff]
  %v766 = vld [vmem:[%s7 + $0x250] sm:$0xff]
  %v767 = vld [vmem:[%s7 + $0x258] sm:$0xff]
  %v768 = vld [vmem:[%s7 + $0x260] sm:$0xff]
  %v769 = vld [vmem:[%s7 + $0x268] sm:$0xff]
  %v770 = vld [vmem:[%s7 + $0x270] sm:$0xff]
  %v771 = vld [vmem:[%s7 + $0x278] sm:$0xff]
  %v772 = vld [vmem:[%s7 + $0x280] sm:$0xff]
  %v773 = vld [vmem:[%s7 + $0x288] sm:$0xff]
  %v774 = vld [vmem:[%s7 + $0x290] sm:$0xff]
  %v775 = vld [vmem:[%s7 + $0x298] sm:$0xff]
  %v776 = vld [vmem:[%s7 + $0x2a0] sm:$0xff]
  %v777 = vld [vmem:[%s7 + $0x2a8] sm:$0xff]
  %v778 = vld [vmem:[%s7 + $0x2b0] sm:$0xff]
  %v779 = vld [vmem:[%s7 + $0x2b8] sm:$0xff]
  %v780 = vld [vmem:[%s7 + $0x2c0] sm:$0xff]
  %v781 = vld [vmem:[%s7 + $0x2c8] sm:$0xff]
  %v782 = vld [vmem:[%s7 + $0x2d0] sm:$0xff]
  %v783 = vld [vmem:[%s7 + $0x2d8] sm:$0xff]
  %v784 = vld [vmem:[%s7 + $0x2e0] sm:$0xff]
  %v785 = vld [vmem:[%s7 + $0x2e8] sm:$0xff]
  %v786 = vld [vmem:[%s7 + $0x2f0] sm:$0xff]
  %v787 = vld [vmem:[%s7 + $0x2f8] sm:$0xff]
  %v788 = vld [vmem:[%s7 + $0x300] sm:$0xff]
  %v789 = vld [vmem:[%s7 + $0x308] sm:$0xff]
  %v790 = vld [vmem:[%s7 + $0x310] sm:$0xff]
  %v791 = vld [vmem:[%s7 + $0x318] sm:$0xff]
  %v792 = vld [vmem:[%s7 + $0x320] sm:$0xff]
  %v793 = vld [vmem:[%s7 + $0x328] sm:$0xff]
  %v794 = vld [vmem:[%s7 + $0x330] sm:$0xff]
  %v795 = vld [vmem:[%s7 + $0x338] sm:$0xff]
  %v796 = vld [vmem:[%s7 + $0x340] sm:$0xff]
  %v797 = vld [vmem:[%s7 + $0x348] sm:$0xff]
  %v798 = vld [vmem:[%s7 + $0x350] sm:$0xff]
  %v799 = vld [vmem:[%s7 + $0x358] sm:$0xff]
  %v800 = vld [vmem:[%s7 + $0x360] sm:$0xff]
  %v801 = vld [vmem:[%s7 + $0x368] sm:$0xff]
  %v802 = vld [vmem:[%s7 + $0x370] sm:$0xff]
  %v803 = vld [vmem:[%s7 + $0x378] sm:$0xff]
  %v804 = vld [vmem:[%s7 + $0x380] sm:$0xff]
  %v805 = vld [vmem:[%s7 + $0x388] sm:$0xff]
  %v806 = vld [vmem:[%s7 + $0x390] sm:$0xff]
  %v807 = vld [vmem:[%s7 + $0x398] sm:$0xff]
  %v808 = vld [vmem:[%s7 + $0x3a0] sm:$0xff]
  %v809 = vld [vmem:[%s7 + $0x3a8] sm:$0xff]
  %v810 = vld [vmem:[%s7 + $0x3b0] sm:$0xff]
  %v811 = vld [vmem:[%s7 + $0x3b8] sm:$0xff]
  %v812 = vld [vmem:[%s7 + $0x3c0] sm:$0xff]
  %v813 = vld [vmem:[%s7 + $0x3c8] sm:$0xff]
  %v814 = vld [vmem:[%s7 + $0x3d0] sm:$0xff]
  %v815 = vld [vmem:[%s7 + $0x3d8] sm:$0xff]
  %v816 = vld [vmem:[%s7 + $0x3e0] sm:$0xff]
  %v817 = vld [vmem:[%s7 + $0x3e8] sm:$0xff]
  %v818 = vld [vmem:[%s7 + $0x3f0] sm:$0xff]
  %v819 = vld [vmem:[%s7 + $0x3f8] sm:$0xff]
  %s820 = scalar_lea.vmem %s12, 7
  %v821 = vld [vmem:[%s820] ss:$8 sm:$0xf]
  %v823 = vlaneseq
  %v824 = vshrl.u32 %v823, 7
  %v825 = vsub.s32 0, %v824
  %v826 = vrot.slane %v821, %v825
  %v827 = vlaneseq
  %v828 = vshrl.u32 %v827, 7
  %v829 = vsub.s32 1, %v828
  %v830 = vrot.slane %v821, %v829
  %v831 = vlaneseq
  %v832 = vshrl.u32 %v831, 7
  %v833 = vsub.s32 2, %v832
  %v834 = vrot.slane %v821, %v833
  %v835 = vlaneseq
  %v836 = vshrl.u32 %v835, 7
  %v837 = vsub.s32 3, %v836
  %v838 = vrot.slane %v821, %v837
  %843 = vmatprep.subr.mxu0 %v693
  %844 = vmatpush1.msra.mxu0 %v692
  %845 = vmatprep.subr.mxu0 %v697
  %846 = vmatpush1.msra.mxu0 %v696
  %847 = vmatprep.subr.mxu0 %v701
  %848 = vmatpush1.msra.mxu0 %v700
  %849 = vmatprep.subr.mxu0 %v705
  %850 = vmatpush1.msra.mxu0 %v704
  %851 = vmatprep.subr.mxu0 %v709
  %852 = vmatpush1.msra.mxu0 %v708
  %853 = vmatprep.subr.mxu0 %v713
  %854 = vmatpush1.msra.mxu0 %v712
  %855 = vmatprep.subr.mxu0 %v717
  %856 = vmatpush1.msra.mxu0 %v716
  %857 = vmatprep.subr.mxu0 %v721
  %858 = vmatpush1.msra.mxu0 %v720
  %859 = vmatprep.subr.mxu0 %v725
  %860 = vmatpush1.msra.mxu0 %v724
  %861 = vmatprep.subr.mxu0 %v729
  %862 = vmatpush1.msra.mxu0 %v728
  %863 = vmatprep.subr.mxu0 %v733
  %864 = vmatpush1.msra.mxu0 %v732
  %865 = vmatprep.subr.mxu0 %v737
  %866 = vmatpush1.msra.mxu0 %v736
  %867 = vmatprep.subr.mxu0 %v741
  %868 = vmatpush1.msra.mxu0 %v740
  %869 = vmatprep.subr.mxu0 %v745
  %870 = vmatpush1.msra.mxu0 %v744
  %871 = vmatprep.subr.mxu0 %v749
  %872 = vmatpush1.msra.mxu0 %v748
  %873 = vmatprep.subr.mxu0 %v753
  %874 = vmatpush1.msra.mxu0 %v752
  %875 = vmatprep.subr.mxu0 %v757
  %876 = vmatpush1.msra.mxu0 %v756
  %877 = vmatprep.subr.mxu0 %v761
  %878 = vmatpush1.msra.mxu0 %v760
  %879 = vmatprep.subr.mxu0 %v765
  %880 = vmatpush1.msra.mxu0 %v764
  %881 = vmatprep.subr.mxu0 %v769
  %882 = vmatpush1.msra.mxu0 %v768
  %883 = vmatprep.subr.mxu0 %v773
  %884 = vmatpush1.msra.mxu0 %v772
  %885 = vmatprep.subr.mxu0 %v777
  %886 = vmatpush1.msra.mxu0 %v776
  %887 = vmatprep.subr.mxu0 %v781
  %888 = vmatpush1.msra.mxu0 %v780
  %889 = vmatprep.subr.mxu0 %v785
  %890 = vmatpush1.msra.mxu0 %v784
  %891 = vmatprep.subr.mxu0 %v789
  %892 = vmatpush1.msra.mxu0 %v788
  %893 = vmatprep.subr.mxu0 %v793
  %894 = vmatpush1.msra.mxu0 %v792
  %895 = vmatprep.subr.mxu0 %v797
  %896 = vmatpush1.msra.mxu0 %v796
  %897 = vmatprep.subr.mxu0 %v801
  %898 = vmatpush1.msra.mxu0 %v800
  %899 = vmatprep.subr.mxu0 %v805
  %900 = vmatpush1.msra.mxu0 %v804
  %901 = vmatprep.subr.mxu0 %v809
  %902 = vmatpush1.msra.mxu0 %v808
  %903 = vmatprep.subr.mxu0 %v813
  %904 = vmatpush1.msra.mxu0 %v812
  %905 = vmatprep.subr.mxu0 %v817
  %906 = vmatpush1.msra.mxu0 %v816
  %907 = vmatprep.mubr.f32.mxu0 %v691
  %908 = vmatmul.mubr.f32.gmra.mrb[0].mxu0 %v690
  %v909 = vpop.f32.mrb[0].mxu0
  %v910 = vadd.f32 %v826, %v909
  %v911 = vpop.f32.mrb[0].mxu0
  %v912 = vadd.f32 %v830, %v911
  %913 = vdwg.mxu0
  %914 = vmatprep.subr.mxu0 %v695
  %915 = vmatpush1.msra.mxu0 %v694
  %916 = vmatprep.subr.mxu0 %v699
  %917 = vmatpush1.msra.mxu0 %v698
  %918 = vmatprep.subr.mxu0 %v703
  %919 = vmatpush1.msra.mxu0 %v702
  %920 = vmatprep.subr.mxu0 %v707
  %921 = vmatpush1.msra.mxu0 %v706
  %922 = vmatprep.subr.mxu0 %v711
  %923 = vmatpush1.msra.mxu0 %v710
  %924 = vmatprep.subr.mxu0 %v715
  %925 = vmatpush1.msra.mxu0 %v714
  %926 = vmatprep.subr.mxu0 %v719
  %927 = vmatpush1.msra.mxu0 %v718
  %928 = vmatprep.subr.mxu0 %v723
  %929 = vmatpush1.msra.mxu0 %v722
  %930 = vmatprep.subr.mxu0 %v727
  %931 = vmatpush1.msra.mxu0 %v726
  %932 = vmatprep.subr.mxu0 %v731
  %933 = vmatpush1.msra.mxu0 %v730
  %934 = vmatprep.subr.mxu0 %v735
  %935 = vmatpush1.msra.mxu0 %v734
  %936 = vmatprep.subr.mxu0 %v739
  %937 = vmatpush1.msra.mxu0 %v738
  %938 = vmatprep.subr.mxu0 %v743
  %939 = vmatpush1.msra.mxu0 %v742
  %940 = vmatprep.subr.mxu0 %v747
  %941 = vmatpush1.msra.mxu0 %v746
  %942 = vmatprep.subr.mxu0 %v751
  %943 = vmatpush1.msra.mxu0 %v750
  %944 = vmatprep.subr.mxu0 %v755
  %945 = vmatpush1.msra.mxu0 %v754
  %946 = vmatprep.subr.mxu0 %v759
  %947 = vmatpush1.msra.mxu0 %v758
  %948 = vmatprep.subr.mxu0 %v763
  %949 = vmatpush1.msra.mxu0 %v762
  %950 = vmatprep.subr.mxu0 %v767
  %951 = vmatpush1.msra.mxu0 %v766
  %952 = vmatprep.subr.mxu0 %v771
  %953 = vmatpush1.msra.mxu0 %v770
  %954 = vmatprep.subr.mxu0 %v775
  %955 = vmatpush1.msra.mxu0 %v774
  %956 = vmatprep.subr.mxu0 %v779
  %957 = vmatpush1.msra.mxu0 %v778
  %958 = vmatprep.subr.mxu0 %v783
  %959 = vmatpush1.msra.mxu0 %v782
  %960 = vmatprep.subr.mxu0 %v787
  %961 = vmatpush1.msra.mxu0 %v786
  %962 = vmatprep.subr.mxu0 %v791
  %963 = vmatpush1.msra.mxu0 %v790
  %964 = vmatprep.subr.mxu0 %v795
  %965 = vmatpush1.msra.mxu0 %v794
  %966 = vmatprep.subr.mxu0 %v799
  %967 = vmatpush1.msra.mxu0 %v798
  %968 = vmatprep.subr.mxu0 %v803
  %969 = vmatpush1.msra.mxu0 %v802
  %970 = vmatprep.subr.mxu0 %v807
  %971 = vmatpush1.msra.mxu0 %v806
  %972 = vmatprep.subr.mxu0 %v811
  %973 = vmatpush1.msra.mxu0 %v810
  %974 = vmatprep.subr.mxu0 %v815
  %975 = vmatpush1.msra.mxu0 %v814
  %976 = vmatprep.subr.mxu0 %v819
  %977 = vmatpush1.msra.mxu0 %v818
  %978 = vmatprep.mubr.f32.mxu0 %v691
  %979 = vmatmul.mubr.f32.gmra.mrb[0].mxu0 %v690
  %v980 = vpop.f32.mrb[0].mxu0
  %v981 = vadd.f32 %v834, %v980
  %v982 = vpop.f32.mrb[0].mxu0
  %v983 = vadd.f32 %v838, %v982
  %984 = vdwg.mxu0
  %v985 = vld [vmem:[%s8] sm:$0xff]
  %v986 = vld [vmem:[%s8 + $0x8] sm:$0xff]
  %v987 = vld [vmem:[%s8 + $0x10] sm:$0xff]
  %v988 = vld [vmem:[%s8 + $0x18] sm:$0xff]
  %v989 = vld [vmem:[%s8 + $0x20] sm:$0xff]
  %v990 = vld [vmem:[%s8 + $0x28] sm:$0xff]
  %v991 = vld [vmem:[%s8 + $0x30] sm:$0xff]
  %v992 = vld [vmem:[%s8 + $0x38] sm:$0xff]
  %v993 = vld [vmem:[%s8 + $0x40] sm:$0xff]
  %v994 = vld [vmem:[%s8 + $0x48] sm:$0xff]
  %v995 = vld [vmem:[%s8 + $0x50] sm:$0xff]
  %v996 = vld [vmem:[%s8 + $0x58] sm:$0xff]
  %v997 = vld [vmem:[%s8 + $0x60] sm:$0xff]
  %v998 = vld [vmem:[%s8 + $0x68] sm:$0xff]
  %v999 = vld [vmem:[%s8 + $0x70] sm:$0xff]
  %v1000 = vld [vmem:[%s8 + $0x78] sm:$0xff]
  %v1001 = vld [vmem:[%s8 + $0x80] sm:$0xff]
  %v1002 = vld [vmem:[%s8 + $0x88] sm:$0xff]
  %v1003 = vld [vmem:[%s8 + $0x90] sm:$0xff]
  %v1004 = vld [vmem:[%s8 + $0x98] sm:$0xff]
  %v1005 = vld [vmem:[%s8 + $0xa0] sm:$0xff]
  %v1006 = vld [vmem:[%s8 + $0xa8] sm:$0xff]
  %v1007 = vld [vmem:[%s8 + $0xb0] sm:$0xff]
  %v1008 = vld [vmem:[%s8 + $0xb8] sm:$0xff]
  %v1009 = vld [vmem:[%s8 + $0xc0] sm:$0xff]
  %v1010 = vld [vmem:[%s8 + $0xc8] sm:$0xff]
  %v1011 = vld [vmem:[%s8 + $0xd0] sm:$0xff]
  %v1012 = vld [vmem:[%s8 + $0xd8] sm:$0xff]
  %v1013 = vld [vmem:[%s8 + $0xe0] sm:$0xff]
  %v1014 = vld [vmem:[%s8 + $0xe8] sm:$0xff]
  %v1015 = vld [vmem:[%s8 + $0xf0] sm:$0xff]
  %v1016 = vld [vmem:[%s8 + $0xf8] sm:$0xff]
  %v1017 = vld [vmem:[%s8 + $0x100] sm:$0xff]
  %v1018 = vld [vmem:[%s8 + $0x108] sm:$0xff]
  %v1019 = vld [vmem:[%s8 + $0x110] sm:$0xff]
  %v1020 = vld [vmem:[%s8 + $0x118] sm:$0xff]
  %v1021 = vld [vmem:[%s8 + $0x120] sm:$0xff]
  %v1022 = vld [vmem:[%s8 + $0x128] sm:$0xff]
  %v1023 = vld [vmem:[%s8 + $0x130] sm:$0xff]
  %v1024 = vld [vmem:[%s8 + $0x138] sm:$0xff]
  %v1025 = vld [vmem:[%s8 + $0x140] sm:$0xff]
  %v1026 = vld [vmem:[%s8 + $0x148] sm:$0xff]
  %v1027 = vld [vmem:[%s8 + $0x150] sm:$0xff]
  %v1028 = vld [vmem:[%s8 + $0x158] sm:$0xff]
  %v1029 = vld [vmem:[%s8 + $0x160] sm:$0xff]
  %v1030 = vld [vmem:[%s8 + $0x168] sm:$0xff]
  %v1031 = vld [vmem:[%s8 + $0x170] sm:$0xff]
  %v1032 = vld [vmem:[%s8 + $0x178] sm:$0xff]
  %v1033 = vld [vmem:[%s8 + $0x180] sm:$0xff]
  %v1034 = vld [vmem:[%s8 + $0x188] sm:$0xff]
  %v1035 = vld [vmem:[%s8 + $0x190] sm:$0xff]
  %v1036 = vld [vmem:[%s8 + $0x198] sm:$0xff]
  %v1037 = vld [vmem:[%s8 + $0x1a0] sm:$0xff]
  %v1038 = vld [vmem:[%s8 + $0x1a8] sm:$0xff]
  %v1039 = vld [vmem:[%s8 + $0x1b0] sm:$0xff]
  %v1040 = vld [vmem:[%s8 + $0x1b8] sm:$0xff]
  %v1041 = vld [vmem:[%s8 + $0x1c0] sm:$0xff]
  %v1042 = vld [vmem:[%s8 + $0x1c8] sm:$0xff]
  %v1043 = vld [vmem:[%s8 + $0x1d0] sm:$0xff]
  %v1044 = vld [vmem:[%s8 + $0x1d8] sm:$0xff]
  %v1045 = vld [vmem:[%s8 + $0x1e0] sm:$0xff]
  %v1046 = vld [vmem:[%s8 + $0x1e8] sm:$0xff]
  %v1047 = vld [vmem:[%s8 + $0x1f0] sm:$0xff]
  %v1048 = vld [vmem:[%s8 + $0x1f8] sm:$0xff]
  %v1049 = vld [vmem:[%s8 + $0x200] sm:$0xff]
  %v1050 = vld [vmem:[%s8 + $0x208] sm:$0xff]
  %v1051 = vld [vmem:[%s8 + $0x210] sm:$0xff]
  %v1052 = vld [vmem:[%s8 + $0x218] sm:$0xff]
  %v1053 = vld [vmem:[%s8 + $0x220] sm:$0xff]
  %v1054 = vld [vmem:[%s8 + $0x228] sm:$0xff]
  %v1055 = vld [vmem:[%s8 + $0x230] sm:$0xff]
  %v1056 = vld [vmem:[%s8 + $0x238] sm:$0xff]
  %v1057 = vld [vmem:[%s8 + $0x240] sm:$0xff]
  %v1058 = vld [vmem:[%s8 + $0x248] sm:$0xff]
  %v1059 = vld [vmem:[%s8 + $0x250] sm:$0xff]
  %v1060 = vld [vmem:[%s8 + $0x258] sm:$0xff]
  %v1061 = vld [vmem:[%s8 + $0x260] sm:$0xff]
  %v1062 = vld [vmem:[%s8 + $0x268] sm:$0xff]
  %v1063 = vld [vmem:[%s8 + $0x270] sm:$0xff]
  %v1064 = vld [vmem:[%s8 + $0x278] sm:$0xff]
  %v1065 = vld [vmem:[%s8 + $0x280] sm:$0xff]
  %v1066 = vld [vmem:[%s8 + $0x288] sm:$0xff]
  %v1067 = vld [vmem:[%s8 + $0x290] sm:$0xff]
  %v1068 = vld [vmem:[%s8 + $0x298] sm:$0xff]
  %v1069 = vld [vmem:[%s8 + $0x2a0] sm:$0xff]
  %v1070 = vld [vmem:[%s8 + $0x2a8] sm:$0xff]
  %v1071 = vld [vmem:[%s8 + $0x2b0] sm:$0xff]
  %v1072 = vld [vmem:[%s8 + $0x2b8] sm:$0xff]
  %v1073 = vld [vmem:[%s8 + $0x2c0] sm:$0xff]
  %v1074 = vld [vmem:[%s8 + $0x2c8] sm:$0xff]
  %v1075 = vld [vmem:[%s8 + $0x2d0] sm:$0xff]
  %v1076 = vld [vmem:[%s8 + $0x2d8] sm:$0xff]
  %v1077 = vld [vmem:[%s8 + $0x2e0] sm:$0xff]
  %v1078 = vld [vmem:[%s8 + $0x2e8] sm:$0xff]
  %v1079 = vld [vmem:[%s8 + $0x2f0] sm:$0xff]
  %v1080 = vld [vmem:[%s8 + $0x2f8] sm:$0xff]
  %v1081 = vld [vmem:[%s8 + $0x300] sm:$0xff]
  %v1082 = vld [vmem:[%s8 + $0x308] sm:$0xff]
  %v1083 = vld [vmem:[%s8 + $0x310] sm:$0xff]
  %v1084 = vld [vmem:[%s8 + $0x318] sm:$0xff]
  %v1085 = vld [vmem:[%s8 + $0x320] sm:$0xff]
  %v1086 = vld [vmem:[%s8 + $0x328] sm:$0xff]
  %v1087 = vld [vmem:[%s8 + $0x330] sm:$0xff]
  %v1088 = vld [vmem:[%s8 + $0x338] sm:$0xff]
  %v1089 = vld [vmem:[%s8 + $0x340] sm:$0xff]
  %v1090 = vld [vmem:[%s8 + $0x348] sm:$0xff]
  %v1091 = vld [vmem:[%s8 + $0x350] sm:$0xff]
  %v1092 = vld [vmem:[%s8 + $0x358] sm:$0xff]
  %v1093 = vld [vmem:[%s8 + $0x360] sm:$0xff]
  %v1094 = vld [vmem:[%s8 + $0x368] sm:$0xff]
  %v1095 = vld [vmem:[%s8 + $0x370] sm:$0xff]
  %v1096 = vld [vmem:[%s8 + $0x378] sm:$0xff]
  %v1097 = vld [vmem:[%s8 + $0x380] sm:$0xff]
  %v1098 = vld [vmem:[%s8 + $0x388] sm:$0xff]
  %v1099 = vld [vmem:[%s8 + $0x390] sm:$0xff]
  %v1100 = vld [vmem:[%s8 + $0x398] sm:$0xff]
  %v1101 = vld [vmem:[%s8 + $0x3a0] sm:$0xff]
  %v1102 = vld [vmem:[%s8 + $0x3a8] sm:$0xff]
  %v1103 = vld [vmem:[%s8 + $0x3b0] sm:$0xff]
  %v1104 = vld [vmem:[%s8 + $0x3b8] sm:$0xff]
  %v1105 = vld [vmem:[%s8 + $0x3c0] sm:$0xff]
  %v1106 = vld [vmem:[%s8 + $0x3c8] sm:$0xff]
  %v1107 = vld [vmem:[%s8 + $0x3d0] sm:$0xff]
  %v1108 = vld [vmem:[%s8 + $0x3d8] sm:$0xff]
  %v1109 = vld [vmem:[%s8 + $0x3e0] sm:$0xff]
  %v1110 = vld [vmem:[%s8 + $0x3e8] sm:$0xff]
  %v1111 = vld [vmem:[%s8 + $0x3f0] sm:$0xff]
  %v1112 = vld [vmem:[%s8 + $0x3f8] sm:$0xff]
  %v1113 = vld [vmem:[%s8 + $0x400] sm:$0xff]
  %v1114 = vld [vmem:[%s8 + $0x408] sm:$0xff]
  %v1115 = vld [vmem:[%s8 + $0x410] sm:$0xff]
  %v1116 = vld [vmem:[%s8 + $0x418] sm:$0xff]
  %v1117 = vld [vmem:[%s8 + $0x420] sm:$0xff]
  %v1118 = vld [vmem:[%s8 + $0x428] sm:$0xff]
  %v1119 = vld [vmem:[%s8 + $0x430] sm:$0xff]
  %v1120 = vld [vmem:[%s8 + $0x438] sm:$0xff]
  %v1121 = vld [vmem:[%s8 + $0x440] sm:$0xff]
  %v1122 = vld [vmem:[%s8 + $0x448] sm:$0xff]
  %v1123 = vld [vmem:[%s8 + $0x450] sm:$0xff]
  %v1124 = vld [vmem:[%s8 + $0x458] sm:$0xff]
  %v1125 = vld [vmem:[%s8 + $0x460] sm:$0xff]
  %v1126 = vld [vmem:[%s8 + $0x468] sm:$0xff]
  %v1127 = vld [vmem:[%s8 + $0x470] sm:$0xff]
  %v1128 = vld [vmem:[%s8 + $0x478] sm:$0xff]
  %v1129 = vld [vmem:[%s8 + $0x480] sm:$0xff]
  %v1130 = vld [vmem:[%s8 + $0x488] sm:$0xff]
  %v1131 = vld [vmem:[%s8 + $0x490] sm:$0xff]
  %v1132 = vld [vmem:[%s8 + $0x498] sm:$0xff]
  %v1133 = vld [vmem:[%s8 + $0x4a0] sm:$0xff]
  %v1134 = vld [vmem:[%s8 + $0x4a8] sm:$0xff]
  %v1135 = vld [vmem:[%s8 + $0x4b0] sm:$0xff]
  %v1136 = vld [vmem:[%s8 + $0x4b8] sm:$0xff]
  %v1137 = vld [vmem:[%s8 + $0x4c0] sm:$0xff]
  %v1138 = vld [vmem:[%s8 + $0x4c8] sm:$0xff]
  %v1139 = vld [vmem:[%s8 + $0x4d0] sm:$0xff]
  %v1140 = vld [vmem:[%s8 + $0x4d8] sm:$0xff]
  %v1141 = vld [vmem:[%s8 + $0x4e0] sm:$0xff]
  %v1142 = vld [vmem:[%s8 + $0x4e8] sm:$0xff]
  %v1143 = vld [vmem:[%s8 + $0x4f0] sm:$0xff]
  %v1144 = vld [vmem:[%s8 + $0x4f8] sm:$0xff]
  %v1145 = vld [vmem:[%s8 + $0x500] sm:$0xff]
  %v1146 = vld [vmem:[%s8 + $0x508] sm:$0xff]
  %v1147 = vld [vmem:[%s8 + $0x510] sm:$0xff]
  %v1148 = vld [vmem:[%s8 + $0x518] sm:$0xff]
  %v1149 = vld [vmem:[%s8 + $0x520] sm:$0xff]
  %v1150 = vld [vmem:[%s8 + $0x528] sm:$0xff]
  %v1151 = vld [vmem:[%s8 + $0x530] sm:$0xff]
  %v1152 = vld [vmem:[%s8 + $0x538] sm:$0xff]
  %v1153 = vld [vmem:[%s8 + $0x540] sm:$0xff]
  %v1154 = vld [vmem:[%s8 + $0x548] sm:$0xff]
  %v1155 = vld [vmem:[%s8 + $0x550] sm:$0xff]
  %v1156 = vld [vmem:[%s8 + $0x558] sm:$0xff]
  %v1157 = vld [vmem:[%s8 + $0x560] sm:$0xff]
  %v1158 = vld [vmem:[%s8 + $0x568] sm:$0xff]
  %v1159 = vld [vmem:[%s8 + $0x570] sm:$0xff]
  %v1160 = vld [vmem:[%s8 + $0x578] sm:$0xff]
  %v1161 = vld [vmem:[%s8 + $0x580] sm:$0xff]
  %v1162 = vld [vmem:[%s8 + $0x588] sm:$0xff]
  %v1163 = vld [vmem:[%s8 + $0x590] sm:$0xff]
  %v1164 = vld [vmem:[%s8 + $0x598] sm:$0xff]
  %v1165 = vld [vmem:[%s8 + $0x5a0] sm:$0xff]
  %v1166 = vld [vmem:[%s8 + $0x5a8] sm:$0xff]
  %v1167 = vld [vmem:[%s8 + $0x5b0] sm:$0xff]
  %v1168 = vld [vmem:[%s8 + $0x5b8] sm:$0xff]
  %v1169 = vld [vmem:[%s8 + $0x5c0] sm:$0xff]
  %v1170 = vld [vmem:[%s8 + $0x5c8] sm:$0xff]
  %v1171 = vld [vmem:[%s8 + $0x5d0] sm:$0xff]
  %v1172 = vld [vmem:[%s8 + $0x5d8] sm:$0xff]
  %v1173 = vld [vmem:[%s8 + $0x5e0] sm:$0xff]
  %v1174 = vld [vmem:[%s8 + $0x5e8] sm:$0xff]
  %v1175 = vld [vmem:[%s8 + $0x5f0] sm:$0xff]
  %v1176 = vld [vmem:[%s8 + $0x5f8] sm:$0xff]
  %v1177 = vld [vmem:[%s8 + $0x600] sm:$0xff]
  %v1178 = vld [vmem:[%s8 + $0x608] sm:$0xff]
  %v1179 = vld [vmem:[%s8 + $0x610] sm:$0xff]
  %v1180 = vld [vmem:[%s8 + $0x618] sm:$0xff]
  %v1181 = vld [vmem:[%s8 + $0x620] sm:$0xff]
  %v1182 = vld [vmem:[%s8 + $0x628] sm:$0xff]
  %v1183 = vld [vmem:[%s8 + $0x630] sm:$0xff]
  %v1184 = vld [vmem:[%s8 + $0x638] sm:$0xff]
  %v1185 = vld [vmem:[%s8 + $0x640] sm:$0xff]
  %v1186 = vld [vmem:[%s8 + $0x648] sm:$0xff]
  %v1187 = vld [vmem:[%s8 + $0x650] sm:$0xff]
  %v1188 = vld [vmem:[%s8 + $0x658] sm:$0xff]
  %v1189 = vld [vmem:[%s8 + $0x660] sm:$0xff]
  %v1190 = vld [vmem:[%s8 + $0x668] sm:$0xff]
  %v1191 = vld [vmem:[%s8 + $0x670] sm:$0xff]
  %v1192 = vld [vmem:[%s8 + $0x678] sm:$0xff]
  %v1193 = vld [vmem:[%s8 + $0x680] sm:$0xff]
  %v1194 = vld [vmem:[%s8 + $0x688] sm:$0xff]
  %v1195 = vld [vmem:[%s8 + $0x690] sm:$0xff]
  %v1196 = vld [vmem:[%s8 + $0x698] sm:$0xff]
  %v1197 = vld [vmem:[%s8 + $0x6a0] sm:$0xff]
  %v1198 = vld [vmem:[%s8 + $0x6a8] sm:$0xff]
  %v1199 = vld [vmem:[%s8 + $0x6b0] sm:$0xff]
  %v1200 = vld [vmem:[%s8 + $0x6b8] sm:$0xff]
  %v1201 = vld [vmem:[%s8 + $0x6c0] sm:$0xff]
  %v1202 = vld [vmem:[%s8 + $0x6c8] sm:$0xff]
  %v1203 = vld [vmem:[%s8 + $0x6d0] sm:$0xff]
  %v1204 = vld [vmem:[%s8 + $0x6d8] sm:$0xff]
  %v1205 = vld [vmem:[%s8 + $0x6e0] sm:$0xff]
  %v1206 = vld [vmem:[%s8 + $0x6e8] sm:$0xff]
  %v1207 = vld [vmem:[%s8 + $0x6f0] sm:$0xff]
  %v1208 = vld [vmem:[%s8 + $0x6f8] sm:$0xff]
  %v1209 = vld [vmem:[%s8 + $0x700] sm:$0xff]
  %v1210 = vld [vmem:[%s8 + $0x708] sm:$0xff]
  %v1211 = vld [vmem:[%s8 + $0x710] sm:$0xff]
  %v1212 = vld [vmem:[%s8 + $0x718] sm:$0xff]
  %v1213 = vld [vmem:[%s8 + $0x720] sm:$0xff]
  %v1214 = vld [vmem:[%s8 + $0x728] sm:$0xff]
  %v1215 = vld [vmem:[%s8 + $0x730] sm:$0xff]
  %v1216 = vld [vmem:[%s8 + $0x738] sm:$0xff]
  %v1217 = vld [vmem:[%s8 + $0x740] sm:$0xff]
  %v1218 = vld [vmem:[%s8 + $0x748] sm:$0xff]
  %v1219 = vld [vmem:[%s8 + $0x750] sm:$0xff]
  %v1220 = vld [vmem:[%s8 + $0x758] sm:$0xff]
  %v1221 = vld [vmem:[%s8 + $0x760] sm:$0xff]
  %v1222 = vld [vmem:[%s8 + $0x768] sm:$0xff]
  %v1223 = vld [vmem:[%s8 + $0x770] sm:$0xff]
  %v1224 = vld [vmem:[%s8 + $0x778] sm:$0xff]
  %v1225 = vld [vmem:[%s8 + $0x780] sm:$0xff]
  %v1226 = vld [vmem:[%s8 + $0x788] sm:$0xff]
  %v1227 = vld [vmem:[%s8 + $0x790] sm:$0xff]
  %v1228 = vld [vmem:[%s8 + $0x798] sm:$0xff]
  %v1229 = vld [vmem:[%s8 + $0x7a0] sm:$0xff]
  %v1230 = vld [vmem:[%s8 + $0x7a8] sm:$0xff]
  %v1231 = vld [vmem:[%s8 + $0x7b0] sm:$0xff]
  %v1232 = vld [vmem:[%s8 + $0x7b8] sm:$0xff]
  %v1233 = vld [vmem:[%s8 + $0x7c0] sm:$0xff]
  %v1234 = vld [vmem:[%s8 + $0x7c8] sm:$0xff]
  %v1235 = vld [vmem:[%s8 + $0x7d0] sm:$0xff]
  %v1236 = vld [vmem:[%s8 + $0x7d8] sm:$0xff]
  %v1237 = vld [vmem:[%s8 + $0x7e0] sm:$0xff]
  %v1238 = vld [vmem:[%s8 + $0x7e8] sm:$0xff]
  %v1239 = vld [vmem:[%s8 + $0x7f0] sm:$0xff]
  %v1240 = vld [vmem:[%s8 + $0x7f8] sm:$0xff]
  %s1241 = scalar_lea.vmem %s12, 32
  %v1242 = vld [vmem:[%s1241] ss:$8 sm:$0xf]
  %v1244 = vlaneseq
  %v1245 = vshrl.u32 %v1244, 7
  %v1246 = vsub.s32 0, %v1245
  %v1247 = vrot.slane %v1242, %v1246
  %v1248 = vlaneseq
  %v1249 = vshrl.u32 %v1248, 7
  %v1250 = vsub.s32 1, %v1249
  %v1251 = vrot.slane %v1242, %v1250
  %v1252 = vlaneseq
  %v1253 = vshrl.u32 %v1252, 7
  %v1254 = vsub.s32 2, %v1253
  %v1255 = vrot.slane %v1242, %v1254
  %v1256 = vlaneseq
  %v1257 = vshrl.u32 %v1256, 7
  %v1258 = vsub.s32 3, %v1257
  %v1259 = vrot.slane %v1242, %v1258
  %1264 = vmatprep.subr.mxu0 %v986
  %1265 = vmatpush1.msra.mxu0 %v985
  %1266 = vmatprep.subr.mxu0 %v990
  %1267 = vmatpush1.msra.mxu0 %v989
  %1268 = vmatprep.subr.mxu0 %v994
  %1269 = vmatpush1.msra.mxu0 %v993
  %1270 = vmatprep.subr.mxu0 %v998
  %1271 = vmatpush1.msra.mxu0 %v997
  %1272 = vmatprep.subr.mxu0 %v1002
  %1273 = vmatpush1.msra.mxu0 %v1001
  %1274 = vmatprep.subr.mxu0 %v1006
  %1275 = vmatpush1.msra.mxu0 %v1005
  %1276 = vmatprep.subr.mxu0 %v1010
  %1277 = vmatpush1.msra.mxu0 %v1009
  %1278 = vmatprep.subr.mxu0 %v1014
  %1279 = vmatpush1.msra.mxu0 %v1013
  %1280 = vmatprep.subr.mxu0 %v1018
  %1281 = vmatpush1.msra.mxu0 %v1017
  %1282 = vmatprep.subr.mxu0 %v1022
  %1283 = vmatpush1.msra.mxu0 %v1021
  %1284 = vmatprep.subr.mxu0 %v1026
  %1285 = vmatpush1.msra.mxu0 %v1025
  %1286 = vmatprep.subr.mxu0 %v1030
  %1287 = vmatpush1.msra.mxu0 %v1029
  %1288 = vmatprep.subr.mxu0 %v1034
  %1289 = vmatpush1.msra.mxu0 %v1033
  %1290 = vmatprep.subr.mxu0 %v1038
  %1291 = vmatpush1.msra.mxu0 %v1037
  %1292 = vmatprep.subr.mxu0 %v1042
  %1293 = vmatpush1.msra.mxu0 %v1041
  %1294 = vmatprep.subr.mxu0 %v1046
  %1295 = vmatpush1.msra.mxu0 %v1045
  %1296 = vmatprep.subr.mxu0 %v1050
  %1297 = vmatpush1.msra.mxu0 %v1049
  %1298 = vmatprep.subr.mxu0 %v1054
  %1299 = vmatpush1.msra.mxu0 %v1053
  %1300 = vmatprep.subr.mxu0 %v1058
  %1301 = vmatpush1.msra.mxu0 %v1057
  %1302 = vmatprep.subr.mxu0 %v1062
  %1303 = vmatpush1.msra.mxu0 %v1061
  %1304 = vmatprep.subr.mxu0 %v1066
  %1305 = vmatpush1.msra.mxu0 %v1065
  %1306 = vmatprep.subr.mxu0 %v1070
  %1307 = vmatpush1.msra.mxu0 %v1069
  %1308 = vmatprep.subr.mxu0 %v1074
  %1309 = vmatpush1.msra.mxu0 %v1073
  %1310 = vmatprep.subr.mxu0 %v1078
  %1311 = vmatpush1.msra.mxu0 %v1077
  %1312 = vmatprep.subr.mxu0 %v1082
  %1313 = vmatpush1.msra.mxu0 %v1081
  %1314 = vmatprep.subr.mxu0 %v1086
  %1315 = vmatpush1.msra.mxu0 %v1085
  %1316 = vmatprep.subr.mxu0 %v1090
  %1317 = vmatpush1.msra.mxu0 %v1089
  %1318 = vmatprep.subr.mxu0 %v1094
  %1319 = vmatpush1.msra.mxu0 %v1093
  %1320 = vmatprep.subr.mxu0 %v1098
  %1321 = vmatpush1.msra.mxu0 %v1097
  %1322 = vmatprep.subr.mxu0 %v1102
  %1323 = vmatpush1.msra.mxu0 %v1101
  %1324 = vmatprep.subr.mxu0 %v1106
  %1325 = vmatpush1.msra.mxu0 %v1105
  %1326 = vmatprep.subr.mxu0 %v1110
  %1327 = vmatpush1.msra.mxu0 %v1109
  %1328 = vmatprep.mubr.f32.mxu0 %v912
  %1329 = vmatmul.mubr.f32.gmra.mrb[0].mxu0 %v910
  %v1330 = vpop.f32.mrb[0].mxu0
  %v1331 = vadd.f32 %v1247, %v1330
  %v1332 = vpop.f32.mrb[0].mxu0
  %v1333 = vadd.f32 %v1251, %v1332
  %1334 = vdwg.mxu0
  %1335 = vmatprep.subr.mxu0 %v1114
  %1336 = vmatpush1.msra.mxu0 %v1113
  %1337 = vmatprep.subr.mxu0 %v1118
  %1338 = vmatpush1.msra.mxu0 %v1117
  %1339 = vmatprep.subr.mxu0 %v1122
  %1340 = vmatpush1.msra.mxu0 %v1121
  %1341 = vmatprep.subr.mxu0 %v1126
  %1342 = vmatpush1.msra.mxu0 %v1125
  %1343 = vmatprep.subr.mxu0 %v1130
  %1344 = vmatpush1.msra.mxu0 %v1129
  %1345 = vmatprep.subr.mxu0 %v1134
  %1346 = vmatpush1.msra.mxu0 %v1133
  %1347 = vmatprep.subr.mxu0 %v1138
  %1348 = vmatpush1.msra.mxu0 %v1137
  %1349 = vmatprep.subr.mxu0 %v1142
  %1350 = vmatpush1.msra.mxu0 %v1141
  %1351 = vmatprep.subr.mxu0 %v1146
  %1352 = vmatpush1.msra.mxu0 %v1145
  %1353 = vmatprep.subr.mxu0 %v1150
  %1354 = vmatpush1.msra.mxu0 %v1149
  %1355 = vmatprep.subr.mxu0 %v1154
  %1356 = vmatpush1.msra.mxu0 %v1153
  %1357 = vmatprep.subr.mxu0 %v1158
  %1358 = vmatpush1.msra.mxu0 %v1157
  %1359 = vmatprep.subr.mxu0 %v1162
  %1360 = vmatpush1.msra.mxu0 %v1161
  %1361 = vmatprep.subr.mxu0 %v1166
  %1362 = vmatpush1.msra.mxu0 %v1165
  %1363 = vmatprep.subr.mxu0 %v1170
  %1364 = vmatpush1.msra.mxu0 %v1169
  %1365 = vmatprep.subr.mxu0 %v1174
  %1366 = vmatpush1.msra.mxu0 %v1173
  %1367 = vmatprep.subr.mxu0 %v1178
  %1368 = vmatpush1.msra.mxu0 %v1177
  %1369 = vmatprep.subr.mxu0 %v1182
  %1370 = vmatpush1.msra.mxu0 %v1181
  %1371 = vmatprep.subr.mxu0 %v1186
  %1372 = vmatpush1.msra.mxu0 %v1185
  %1373 = vmatprep.subr.mxu0 %v1190
  %1374 = vmatpush1.msra.mxu0 %v1189
  %1375 = vmatprep.subr.mxu0 %v1194
  %1376 = vmatpush1.msra.mxu0 %v1193
  %1377 = vmatprep.subr.mxu0 %v1198
  %1378 = vmatpush1.msra.mxu0 %v1197
  %1379 = vmatprep.subr.mxu0 %v1202
  %1380 = vmatpush1.msra.mxu0 %v1201
  %1381 = vmatprep.subr.mxu0 %v1206
  %1382 = vmatpush1.msra.mxu0 %v1205
  %1383 = vmatprep.subr.mxu0 %v1210
  %1384 = vmatpush1.msra.mxu0 %v1209
  %1385 = vmatprep.subr.mxu0 %v1214
  %1386 = vmatpush1.msra.mxu0 %v1213
  %1387 = vmatprep.subr.mxu0 %v1218
  %1388 = vmatpush1.msra.mxu0 %v1217
  %1389 = vmatprep.subr.mxu0 %v1222
  %1390 = vmatpush1.msra.mxu0 %v1221
  %1391 = vmatprep.subr.mxu0 %v1226
  %1392 = vmatpush1.msra.mxu0 %v1225
  %1393 = vmatprep.subr.mxu0 %v1230
  %1394 = vmatpush1.msra.mxu0 %v1229
  %1395 = vmatprep.subr.mxu0 %v1234
  %1396 = vmatpush1.msra.mxu0 %v1233
  %1397 = vmatprep.subr.mxu0 %v1238
  %1398 = vmatpush1.msra.mxu0 %v1237
  %1399 = vmatprep.mubr.f32.mxu0 %v983
  %1400 = vmatmul.mubr.f32.gmra.mrb[0].mxu0 %v981
  %v1401 = vpop.f32.mrb[0].mxu0
  %v1402 = vadd.f32 %v1331, %v1401
  %v1403 = vpop.f32.mrb[0].mxu0
  %v1404 = vadd.f32 %v1333, %v1403
  %1405 = vdwg.mxu0
  %1406 = vmatprep.subr.mxu0 %v988
  %1407 = vmatpush1.msra.mxu0 %v987
  %1408 = vmatprep.subr.mxu0 %v992
  %1409 = vmatpush1.msra.mxu0 %v991
  %1410 = vmatprep.subr.mxu0 %v996
  %1411 = vmatpush1.msra.mxu0 %v995
  %1412 = vmatprep.subr.mxu0 %v1000
  %1413 = vmatpush1.msra.mxu0 %v999
  %1414 = vmatprep.subr.mxu0 %v1004
  %1415 = vmatpush1.msra.mxu0 %v1003
  %1416 = vmatprep.subr.mxu0 %v1008
  %1417 = vmatpush1.msra.mxu0 %v1007
  %1418 = vmatprep.subr.mxu0 %v1012
  %1419 = vmatpush1.msra.mxu0 %v1011
  %1420 = vmatprep.subr.mxu0 %v1016
  %1421 = vmatpush1.msra.mxu0 %v1015
  %1422 = vmatprep.subr.mxu0 %v1020
  %1423 = vmatpush1.msra.mxu0 %v1019
  %1424 = vmatprep.subr.mxu0 %v1024
  %1425 = vmatpush1.msra.mxu0 %v1023
  %1426 = vmatprep.subr.mxu0 %v1028
  %1427 = vmatpush1.msra.mxu0 %v1027
  %1428 = vmatprep.subr.mxu0 %v1032
  %1429 = vmatpush1.msra.mxu0 %v1031
  %1430 = vmatprep.subr.mxu0 %v1036
  %1431 = vmatpush1.msra.mxu0 %v1035
  %1432 = vmatprep.subr.mxu0 %v1040
  %1433 = vmatpush1.msra.mxu0 %v1039
  %1434 = vmatprep.subr.mxu0 %v1044
  %1435 = vmatpush1.msra.mxu0 %v1043
  %1436 = vmatprep.subr.mxu0 %v1048
  %1437 = vmatpush1.msra.mxu0 %v1047
  %1438 = vmatprep.subr.mxu0 %v1052
  %1439 = vmatpush1.msra.mxu0 %v1051
  %1440 = vmatprep.subr.mxu0 %v1056
  %1441 = vmatpush1.msra.mxu0 %v1055
  %1442 = vmatprep.subr.mxu0 %v1060
  %1443 = vmatpush1.msra.mxu0 %v1059
  %1444 = vmatprep.subr.mxu0 %v1064
  %1445 = vmatpush1.msra.mxu0 %v1063
  %1446 = vmatprep.subr.mxu0 %v1068
  %1447 = vmatpush1.msra.mxu0 %v1067
  %1448 = vmatprep.subr.mxu0 %v1072
  %1449 = vmatpush1.msra.mxu0 %v1071
  %1450 = vmatprep.subr.mxu0 %v1076
  %1451 = vmatpush1.msra.mxu0 %v1075
  %1452 = vmatprep.subr.mxu0 %v1080
  %1453 = vmatpush1.msra.mxu0 %v1079
  %1454 = vmatprep.subr.mxu0 %v1084
  %1455 = vmatpush1.msra.mxu0 %v1083
  %1456 = vmatprep.subr.mxu0 %v1088
  %1457 = vmatpush1.msra.mxu0 %v1087
  %1458 = vmatprep.subr.mxu0 %v1092
  %1459 = vmatpush1.msra.mxu0 %v1091
  %1460 = vmatprep.subr.mxu0 %v1096
  %1461 = vmatpush1.msra.mxu0 %v1095
  %1462 = vmatprep.subr.mxu0 %v1100
  %1463 = vmatpush1.msra.mxu0 %v1099
  %1464 = vmatprep.subr.mxu0 %v1104
  %1465 = vmatpush1.msra.mxu0 %v1103
  %1466 = vmatprep.subr.mxu0 %v1108
  %1467 = vmatpush1.msra.mxu0 %v1107
  %1468 = vmatprep.subr.mxu0 %v1112
  %1469 = vmatpush1.msra.mxu0 %v1111
  %1470 = vmatprep.mubr.f32.mxu0 %v912
  %1471 = vmatmul.mubr.f32.gmra.mrb[0].mxu0 %v910
  %v1472 = vpop.f32.mrb[0].mxu0
  %v1473 = vadd.f32 %v1255, %v1472
  %v1474 = vpop.f32.mrb[0].mxu0
  %v1475 = vadd.f32 %v1259, %v1474
  %1476 = vdwg.mxu0
  %1477 = vmatprep.subr.mxu0 %v1116
  %1478 = vmatpush1.msra.mxu0 %v1115
  %1479 = vmatprep.subr.mxu0 %v1120
  %1480 = vmatpush1.msra.mxu0 %v1119
  %1481 = vmatprep.subr.mxu0 %v1124
  %1482 = vmatpush1.msra.mxu0 %v1123
  %1483 = vmatprep.subr.mxu0 %v1128
  %1484 = vmatpush1.msra.mxu0 %v1127
  %1485 = vmatprep.subr.mxu0 %v1132
  %1486 = vmatpush1.msra.mxu0 %v1131
  %1487 = vmatprep.subr.mxu0 %v1136
  %1488 = vmatpush1.msra.mxu0 %v1135
  %1489 = vmatprep.subr.mxu0 %v1140
  %1490 = vmatpush1.msra.mxu0 %v1139
  %1491 = vmatprep.subr.mxu0 %v1144
  %1492 = vmatpush1.msra.mxu0 %v1143
  %1493 = vmatprep.subr.mxu0 %v1148
  %1494 = vmatpush1.msra.mxu0 %v1147
  %1495 = vmatprep.subr.mxu0 %v1152
  %1496 = vmatpush1.msra.mxu0 %v1151
  %1497 = vmatprep.subr.mxu0 %v1156
  %1498 = vmatpush1.msra.mxu0 %v1155
  %1499 = vmatprep.subr.mxu0 %v1160
  %1500 = vmatpush1.msra.mxu0 %v1159
  %1501 = vmatprep.subr.mxu0 %v1164
  %1502 = vmatpush1.msra.mxu0 %v1163
  %1503 = vmatprep.subr.mxu0 %v1168
  %1504 = vmatpush1.msra.mxu0 %v1167
  %1505 = vmatprep.subr.mxu0 %v1172
  %1506 = vmatpush1.msra.mxu0 %v1171
  %1507 = vmatprep.subr.mxu0 %v1176
  %1508 = vmatpush1.msra.mxu0 %v1175
  %1509 = vmatprep.subr.mxu0 %v1180
  %1510 = vmatpush1.msra.mxu0 %v1179
  %1511 = vmatprep.subr.mxu0 %v1184
  %1512 = vmatpush1.msra.mxu0 %v1183
  %1513 = vmatprep.subr.mxu0 %v1188
  %1514 = vmatpush1.msra.mxu0 %v1187
  %1515 = vmatprep.subr.mxu0 %v1192
  %1516 = vmatpush1.msra.mxu0 %v1191
  %1517 = vmatprep.subr.mxu0 %v1196
  %1518 = vmatpush1.msra.mxu0 %v1195
  %1519 = vmatprep.subr.mxu0 %v1200
  %1520 = vmatpush1.msra.mxu0 %v1199
  %1521 = vmatprep.subr.mxu0 %v1204
  %1522 = vmatpush1.msra.mxu0 %v1203
  %1523 = vmatprep.subr.mxu0 %v1208
  %1524 = vmatpush1.msra.mxu0 %v1207
  %1525 = vmatprep.subr.mxu0 %v1212
  %1526 = vmatpush1.msra.mxu0 %v1211
  %1527 = vmatprep.subr.mxu0 %v1216
  %1528 = vmatpush1.msra.mxu0 %v1215
  %1529 = vmatprep.subr.mxu0 %v1220
  %1530 = vmatpush1.msra.mxu0 %v1219
  %1531 = vmatprep.subr.mxu0 %v1224
  %1532 = vmatpush1.msra.mxu0 %v1223
  %1533 = vmatprep.subr.mxu0 %v1228
  %1534 = vmatpush1.msra.mxu0 %v1227
  %1535 = vmatprep.subr.mxu0 %v1232
  %1536 = vmatpush1.msra.mxu0 %v1231
  %1537 = vmatprep.subr.mxu0 %v1236
  %1538 = vmatpush1.msra.mxu0 %v1235
  %1539 = vmatprep.subr.mxu0 %v1240
  %1540 = vmatpush1.msra.mxu0 %v1239
  %1541 = vmatprep.mubr.f32.mxu0 %v983
  %1542 = vmatmul.mubr.f32.gmra.mrb[0].mxu0 %v981
  %v1543 = vpop.f32.mrb[0].mxu0
  %v1544 = vadd.f32 %v1473, %v1543
  %v1545 = vpop.f32.mrb[0].mxu0
  %v1546 = vadd.f32 %v1475, %v1545
  %1547 = vdwg.mxu0
  %v1548 = vmax.f32 %v1402, 0.0
  %v1549 = vmax.f32 %v1404, 0.0
  %v1550 = vmax.f32 %v1544, 0.0
  %v1551 = vmax.f32 %v1546, 0.0
  %v1552 = vld [vmem:[%s9] sm:$0xff]
  %v1553 = vld [vmem:[%s9 + $0x8] sm:$0xff]
  %v1554 = vld [vmem:[%s9 + $0x10] sm:$0xff]
  %v1555 = vld [vmem:[%s9 + $0x18] sm:$0xff]
  %v1556 = vld [vmem:[%s9 + $0x20] sm:$0xff]
  %v1557 = vld [vmem:[%s9 + $0x28] sm:$0xff]
  %v1558 = vld [vmem:[%s9 + $0x30] sm:$0xff]
  %v1559 = vld [vmem:[%s9 + $0x38] sm:$0xff]
  %v1560 = vld [vmem:[%s9 + $0x40] sm:$0xff]
  %v1561 = vld [vmem:[%s9 + $0x48] sm:$0xff]
  %v1562 = vld [vmem:[%s9 + $0x50] sm:$0xff]
  %v1563 = vld [vmem:[%s9 + $0x58] sm:$0xff]
  %v1564 = vld [vmem:[%s9 + $0x60] sm:$0xff]
  %v1565 = vld [vmem:[%s9 + $0x68] sm:$0xff]
  %v1566 = vld [vmem:[%s9 + $0x70] sm:$0xff]
  %v1567 = vld [vmem:[%s9 + $0x78] sm:$0xff]
  %v1568 = vld [vmem:[%s9 + $0x80] sm:$0xff]
  %v1569 = vld [vmem:[%s9 + $0x88] sm:$0xff]
  %v1570 = vld [vmem:[%s9 + $0x90] sm:$0xff]
  %v1571 = vld [vmem:[%s9 + $0x98] sm:$0xff]
  %v1572 = vld [vmem:[%s9 + $0xa0] sm:$0xff]
  %v1573 = vld [vmem:[%s9 + $0xa8] sm:$0xff]
  %v1574 = vld [vmem:[%s9 + $0xb0] sm:$0xff]
  %v1575 = vld [vmem:[%s9 + $0xb8] sm:$0xff]
  %v1576 = vld [vmem:[%s9 + $0xc0] sm:$0xff]
  %v1577 = vld [vmem:[%s9 + $0xc8] sm:$0xff]
  %v1578 = vld [vmem:[%s9 + $0xd0] sm:$0xff]
  %v1579 = vld [vmem:[%s9 + $0xd8] sm:$0xff]
  %v1580 = vld [vmem:[%s9 + $0xe0] sm:$0xff]
  %v1581 = vld [vmem:[%s9 + $0xe8] sm:$0xff]
  %v1582 = vld [vmem:[%s9 + $0xf0] sm:$0xff]
  %v1583 = vld [vmem:[%s9 + $0xf8] sm:$0xff]
  %v1584 = vld [vmem:[%s9 + $0x100] sm:$0xff]
  %v1585 = vld [vmem:[%s9 + $0x108] sm:$0xff]
  %v1586 = vld [vmem:[%s9 + $0x110] sm:$0xff]
  %v1587 = vld [vmem:[%s9 + $0x118] sm:$0xff]
  %v1588 = vld [vmem:[%s9 + $0x120] sm:$0xff]
  %v1589 = vld [vmem:[%s9 + $0x128] sm:$0xff]
  %v1590 = vld [vmem:[%s9 + $0x130] sm:$0xff]
  %v1591 = vld [vmem:[%s9 + $0x138] sm:$0xff]
  %v1592 = vld [vmem:[%s9 + $0x140] sm:$0xff]
  %v1593 = vld [vmem:[%s9 + $0x148] sm:$0xff]
  %v1594 = vld [vmem:[%s9 + $0x150] sm:$0xff]
  %v1595 = vld [vmem:[%s9 + $0x158] sm:$0xff]
  %v1596 = vld [vmem:[%s9 + $0x160] sm:$0xff]
  %v1597 = vld [vmem:[%s9 + $0x168] sm:$0xff]
  %v1598 = vld [vmem:[%s9 + $0x170] sm:$0xff]
  %v1599 = vld [vmem:[%s9 + $0x178] sm:$0xff]
  %v1600 = vld [vmem:[%s9 + $0x180] sm:$0xff]
  %v1601 = vld [vmem:[%s9 + $0x188] sm:$0xff]
  %v1602 = vld [vmem:[%s9 + $0x190] sm:$0xff]
  %v1603 = vld [vmem:[%s9 + $0x198] sm:$0xff]
  %v1604 = vld [vmem:[%s9 + $0x1a0] sm:$0xff]
  %v1605 = vld [vmem:[%s9 + $0x1a8] sm:$0xff]
  %v1606 = vld [vmem:[%s9 + $0x1b0] sm:$0xff]
  %v1607 = vld [vmem:[%s9 + $0x1b8] sm:$0xff]
  %v1608 = vld [vmem:[%s9 + $0x1c0] sm:$0xff]
  %v1609 = vld [vmem:[%s9 + $0x1c8] sm:$0xff]
  %v1610 = vld [vmem:[%s9 + $0x1d0] sm:$0xff]
  %v1611 = vld [vmem:[%s9 + $0x1d8] sm:$0xff]
  %v1612 = vld [vmem:[%s9 + $0x1e0] sm:$0xff]
  %v1613 = vld [vmem:[%s9 + $0x1e8] sm:$0xff]
  %v1614 = vld [vmem:[%s9 + $0x1f0] sm:$0xff]
  %v1615 = vld [vmem:[%s9 + $0x1f8] sm:$0xff]
  %v1616 = vld [vmem:[%s9 + $0x200] sm:$0xff]
  %v1617 = vld [vmem:[%s9 + $0x208] sm:$0xff]
  %v1618 = vld [vmem:[%s9 + $0x210] sm:$0xff]
  %v1619 = vld [vmem:[%s9 + $0x218] sm:$0xff]
  %v1620 = vld [vmem:[%s9 + $0x220] sm:$0xff]
  %v1621 = vld [vmem:[%s9 + $0x228] sm:$0xff]
  %v1622 = vld [vmem:[%s9 + $0x230] sm:$0xff]
  %v1623 = vld [vmem:[%s9 + $0x238] sm:$0xff]
  %v1624 = vld [vmem:[%s9 + $0x240] sm:$0xff]
  %v1625 = vld [vmem:[%s9 + $0x248] sm:$0xff]
  %v1626 = vld [vmem:[%s9 + $0x250] sm:$0xff]
  %v1627 = vld [vmem:[%s9 + $0x258] sm:$0xff]
  %v1628 = vld [vmem:[%s9 + $0x260] sm:$0xff]
  %v1629 = vld [vmem:[%s9 + $0x268] sm:$0xff]
  %v1630 = vld [vmem:[%s9 + $0x270] sm:$0xff]
  %v1631 = vld [vmem:[%s9 + $0x278] sm:$0xff]
  %v1632 = vld [vmem:[%s9 + $0x280] sm:$0xff]
  %v1633 = vld [vmem:[%s9 + $0x288] sm:$0xff]
  %v1634 = vld [vmem:[%s9 + $0x290] sm:$0xff]
  %v1635 = vld [vmem:[%s9 + $0x298] sm:$0xff]
  %v1636 = vld [vmem:[%s9 + $0x2a0] sm:$0xff]
  %v1637 = vld [vmem:[%s9 + $0x2a8] sm:$0xff]
  %v1638 = vld [vmem:[%s9 + $0x2b0] sm:$0xff]
  %v1639 = vld [vmem:[%s9 + $0x2b8] sm:$0xff]
  %v1640 = vld [vmem:[%s9 + $0x2c0] sm:$0xff]
  %v1641 = vld [vmem:[%s9 + $0x2c8] sm:$0xff]
  %v1642 = vld [vmem:[%s9 + $0x2d0] sm:$0xff]
  %v1643 = vld [vmem:[%s9 + $0x2d8] sm:$0xff]
  %v1644 = vld [vmem:[%s9 + $0x2e0] sm:$0xff]
  %v1645 = vld [vmem:[%s9 + $0x2e8] sm:$0xff]
  %v1646 = vld [vmem:[%s9 + $0x2f0] sm:$0xff]
  %v1647 = vld [vmem:[%s9 + $0x2f8] sm:$0xff]
  %v1648 = vld [vmem:[%s9 + $0x300] sm:$0xff]
  %v1649 = vld [vmem:[%s9 + $0x308] sm:$0xff]
  %v1650 = vld [vmem:[%s9 + $0x310] sm:$0xff]
  %v1651 = vld [vmem:[%s9 + $0x318] sm:$0xff]
  %v1652 = vld [vmem:[%s9 + $0x320] sm:$0xff]
  %v1653 = vld [vmem:[%s9 + $0x328] sm:$0xff]
  %v1654 = vld [vmem:[%s9 + $0x330] sm:$0xff]
  %v1655 = vld [vmem:[%s9 + $0x338] sm:$0xff]
  %v1656 = vld [vmem:[%s9 + $0x340] sm:$0xff]
  %v1657 = vld [vmem:[%s9 + $0x348] sm:$0xff]
  %v1658 = vld [vmem:[%s9 + $0x350] sm:$0xff]
  %v1659 = vld [vmem:[%s9 + $0x358] sm:$0xff]
  %v1660 = vld [vmem:[%s9 + $0x360] sm:$0xff]
  %v1661 = vld [vmem:[%s9 + $0x368] sm:$0xff]
  %v1662 = vld [vmem:[%s9 + $0x370] sm:$0xff]
  %v1663 = vld [vmem:[%s9 + $0x378] sm:$0xff]
  %v1664 = vld [vmem:[%s9 + $0x380] sm:$0xff]
  %v1665 = vld [vmem:[%s9 + $0x388] sm:$0xff]
  %v1666 = vld [vmem:[%s9 + $0x390] sm:$0xff]
  %v1667 = vld [vmem:[%s9 + $0x398] sm:$0xff]
  %v1668 = vld [vmem:[%s9 + $0x3a0] sm:$0xff]
  %v1669 = vld [vmem:[%s9 + $0x3a8] sm:$0xff]
  %v1670 = vld [vmem:[%s9 + $0x3b0] sm:$0xff]
  %v1671 = vld [vmem:[%s9 + $0x3b8] sm:$0xff]
  %v1672 = vld [vmem:[%s9 + $0x3c0] sm:$0xff]
  %v1673 = vld [vmem:[%s9 + $0x3c8] sm:$0xff]
  %v1674 = vld [vmem:[%s9 + $0x3d0] sm:$0xff]
  %v1675 = vld [vmem:[%s9 + $0x3d8] sm:$0xff]
  %v1676 = vld [vmem:[%s9 + $0x3e0] sm:$0xff]
  %v1677 = vld [vmem:[%s9 + $0x3e8] sm:$0xff]
  %v1678 = vld [vmem:[%s9 + $0x3f0] sm:$0xff]
  %v1679 = vld [vmem:[%s9 + $0x3f8] sm:$0xff]
  %s1680 = scalar_lea.vmem %s12, 33
  %v1681 = vld [vmem:[%s1680] ss:$8 sm:$0x3]
  %v1683 = vlaneseq
  %v1684 = vshrl.u32 %v1683, 7
  %v1685 = vsub.s32 0, %v1684
  %v1686 = vrot.slane %v1681, %v1685
  %v1687 = vlaneseq
  %v1688 = vshrl.u32 %v1687, 7
  %v1689 = vsub.s32 1, %v1688
  %v1690 = vrot.slane %v1681, %v1689
  %1693 = vmatprep.subr.mxu0 %v1553
  %1694 = vmatpush1.msra.mxu0 %v1552
  %1695 = vmatprep.subr.mxu0 %v1555
  %1696 = vmatpush1.msra.mxu0 %v1554
  %1697 = vmatprep.subr.mxu0 %v1557
  %1698 = vmatpush1.msra.mxu0 %v1556
  %1699 = vmatprep.subr.mxu0 %v1559
  %1700 = vmatpush1.msra.mxu0 %v1558
  %1701 = vmatprep.subr.mxu0 %v1561
  %1702 = vmatpush1.msra.mxu0 %v1560
  %1703 = vmatprep.subr.mxu0 %v1563
  %1704 = vmatpush1.msra.mxu0 %v1562
  %1705 = vmatprep.subr.mxu0 %v1565
  %1706 = vmatpush1.msra.mxu0 %v1564
  %1707 = vmatprep.subr.mxu0 %v1567
  %1708 = vmatpush1.msra.mxu0 %v1566
  %1709 = vmatprep.subr.mxu0 %v1569
  %1710 = vmatpush1.msra.mxu0 %v1568
  %1711 = vmatprep.subr.mxu0 %v1571
  %1712 = vmatpush1.msra.mxu0 %v1570
  %1713 = vmatprep.subr.mxu0 %v1573
  %1714 = vmatpush1.msra.mxu0 %v1572
  %1715 = vmatprep.subr.mxu0 %v1575
  %1716 = vmatpush1.msra.mxu0 %v1574
  %1717 = vmatprep.subr.mxu0 %v1577
  %1718 = vmatpush1.msra.mxu0 %v1576
  %1719 = vmatprep.subr.mxu0 %v1579
  %1720 = vmatpush1.msra.mxu0 %v1578
  %1721 = vmatprep.subr.mxu0 %v1581
  %1722 = vmatpush1.msra.mxu0 %v1580
  %1723 = vmatprep.subr.mxu0 %v1583
  %1724 = vmatpush1.msra.mxu0 %v1582
  %1725 = vmatprep.subr.mxu0 %v1585
  %1726 = vmatpush1.msra.mxu0 %v1584
  %1727 = vmatprep.subr.mxu0 %v1587
  %1728 = vmatpush1.msra.mxu0 %v1586
  %1729 = vmatprep.subr.mxu0 %v1589
  %1730 = vmatpush1.msra.mxu0 %v1588
  %1731 = vmatprep.subr.mxu0 %v1591
  %1732 = vmatpush1.msra.mxu0 %v1590
  %1733 = vmatprep.subr.mxu0 %v1593
  %1734 = vmatpush1.msra.mxu0 %v1592
  %1735 = vmatprep.subr.mxu0 %v1595
  %1736 = vmatpush1.msra.mxu0 %v1594
  %1737 = vmatprep.subr.mxu0 %v1597
  %1738 = vmatpush1.msra.mxu0 %v1596
  %1739 = vmatprep.subr.mxu0 %v1599
  %1740 = vmatpush1.msra.mxu0 %v1598
  %1741 = vmatprep.subr.mxu0 %v1601
  %1742 = vmatpush1.msra.mxu0 %v1600
  %1743 = vmatprep.subr.mxu0 %v1603
  %1744 = vmatpush1.msra.mxu0 %v1602
  %1745 = vmatprep.subr.mxu0 %v1605
  %1746 = vmatpush1.msra.mxu0 %v1604
  %1747 = vmatprep.subr.mxu0 %v1607
  %1748 = vmatpush1.msra.mxu0 %v1606
  %1749 = vmatprep.subr.mxu0 %v1609
  %1750 = vmatpush1.msra.mxu0 %v1608
  %1751 = vmatprep.subr.mxu0 %v1611
  %1752 = vmatpush1.msra.mxu0 %v1610
  %1753 = vmatprep.subr.mxu0 %v1613
  %1754 = vmatpush1.msra.mxu0 %v1612
  %1755 = vmatprep.subr.mxu0 %v1615
  %1756 = vmatpush1.msra.mxu0 %v1614
  %1757 = vmatprep.mubr.f32.mxu0 %v1549
  %1758 = vmatmul.mubr.f32.gmra.mrb[0].mxu0 %v1548
  %v1759 = vpop.f32.mrb[0].mxu0
  %v1760 = vadd.f32 %v1686, %v1759
  %v1761 = vpop.f32.mrb[0].mxu0
  %v1762 = vadd.f32 %v1690, %v1761
  %1763 = vdwg.mxu0
  %1764 = vmatprep.subr.mxu0 %v1617
  %1765 = vmatpush1.msra.mxu0 %v1616
  %1766 = vmatprep.subr.mxu0 %v1619
  %1767 = vmatpush1.msra.mxu0 %v1618
  %1768 = vmatprep.subr.mxu0 %v1621
  %1769 = vmatpush1.msra.mxu0 %v1620
  %1770 = vmatprep.subr.mxu0 %v1623
  %1771 = vmatpush1.msra.mxu0 %v1622
  %1772 = vmatprep.subr.mxu0 %v1625
  %1773 = vmatpush1.msra.mxu0 %v1624
  %1774 = vmatprep.subr.mxu0 %v1627
  %1775 = vmatpush1.msra.mxu0 %v1626
  %1776 = vmatprep.subr.mxu0 %v1629
  %1777 = vmatpush1.msra.mxu0 %v1628
  %1778 = vmatprep.subr.mxu0 %v1631
  %1779 = vmatpush1.msra.mxu0 %v1630
  %1780 = vmatprep.subr.mxu0 %v1633
  %1781 = vmatpush1.msra.mxu0 %v1632
  %1782 = vmatprep.subr.mxu0 %v1635
  %1783 = vmatpush1.msra.mxu0 %v1634
  %1784 = vmatprep.subr.mxu0 %v1637
  %1785 = vmatpush1.msra.mxu0 %v1636
  %1786 = vmatprep.subr.mxu0 %v1639
  %1787 = vmatpush1.msra.mxu0 %v1638
  %1788 = vmatprep.subr.mxu0 %v1641
  %1789 = vmatpush1.msra.mxu0 %v1640
  %1790 = vmatprep.subr.mxu0 %v1643
  %1791 = vmatpush1.msra.mxu0 %v1642
  %1792 = vmatprep.subr.mxu0 %v1645
  %1793 = vmatpush1.msra.mxu0 %v1644
  %1794 = vmatprep.subr.mxu0 %v1647
  %1795 = vmatpush1.msra.mxu0 %v1646
  %1796 = vmatprep.subr.mxu0 %v1649
  %1797 = vmatpush1.msra.mxu0 %v1648
  %1798 = vmatprep.subr.mxu0 %v1651
  %1799 = vmatpush1.msra.mxu0 %v1650
  %1800 = vmatprep.subr.mxu0 %v1653
  %1801 = vmatpush1.msra.mxu0 %v1652
  %1802 = vmatprep.subr.mxu0 %v1655
  %1803 = vmatpush1.msra.mxu0 %v1654
  %1804 = vmatprep.subr.mxu0 %v1657
  %1805 = vmatpush1.msra.mxu0 %v1656
  %1806 = vmatprep.subr.mxu0 %v1659
  %1807 = vmatpush1.msra.mxu0 %v1658
  %1808 = vmatprep.subr.mxu0 %v1661
  %1809 = vmatpush1.msra.mxu0 %v1660
  %1810 = vmatprep.subr.mxu0 %v1663
  %1811 = vmatpush1.msra.mxu0 %v1662
  %1812 = vmatprep.subr.mxu0 %v1665
  %1813 = vmatpush1.msra.mxu0 %v1664
  %1814 = vmatprep.subr.mxu0 %v1667
  %1815 = vmatpush1.msra.mxu0 %v1666
  %1816 = vmatprep.subr.mxu0 %v1669
  %1817 = vmatpush1.msra.mxu0 %v1668
  %1818 = vmatprep.subr.mxu0 %v1671
  %1819 = vmatpush1.msra.mxu0 %v1670
  %1820 = vmatprep.subr.mxu0 %v1673
  %1821 = vmatpush1.msra.mxu0 %v1672
  %1822 = vmatprep.subr.mxu0 %v1675
  %1823 = vmatpush1.msra.mxu0 %v1674
  %1824 = vmatprep.subr.mxu0 %v1677
  %1825 = vmatpush1.msra.mxu0 %v1676
  %1826 = vmatprep.subr.mxu0 %v1679
  %1827 = vmatpush1.msra.mxu0 %v1678
  %1828 = vmatprep.mubr.f32.mxu0 %v1551
  %1829 = vmatmul.mubr.f32.gmra.mrb[0].mxu0 %v1550
  %v1830 = vpop.f32.mrb[0].mxu0
  %v1831 = vadd.f32 %v1760, %v1830
  %v1832 = vpop.f32.mrb[0].mxu0
  %v1833 = vadd.f32 %v1762, %v1832
  %1834 = vdwg.mxu0
  %v1835 = vmax.f32 %v1831, 0.0
  %v1836 = vmax.f32 %v1833, 0.0
  %v1837 = vld [vmem:[%s10] sm:$0xff]
  %v1838 = vld [vmem:[%s10 + $0x8] sm:$0xff]
  %v1839 = vld [vmem:[%s10 + $0x10] sm:$0xff]
  %v1840 = vld [vmem:[%s10 + $0x18] sm:$0xff]
  %v1841 = vld [vmem:[%s10 + $0x20] sm:$0xff]
  %v1842 = vld [vmem:[%s10 + $0x28] sm:$0xff]
  %v1843 = vld [vmem:[%s10 + $0x30] sm:$0xff]
  %v1844 = vld [vmem:[%s10 + $0x38] sm:$0xff]
  %v1845 = vld [vmem:[%s10 + $0x40] sm:$0xff]
  %v1846 = vld [vmem:[%s10 + $0x48] sm:$0xff]
  %v1847 = vld [vmem:[%s10 + $0x50] sm:$0xff]
  %v1848 = vld [vmem:[%s10 + $0x58] sm:$0xff]
  %v1849 = vld [vmem:[%s10 + $0x60] sm:$0xff]
  %v1850 = vld [vmem:[%s10 + $0x68] sm:$0xff]
  %v1851 = vld [vmem:[%s10 + $0x70] sm:$0xff]
  %v1852 = vld [vmem:[%s10 + $0x78] sm:$0xff]
  %v1853 = vld [vmem:[%s10 + $0x80] sm:$0xff]
  %v1854 = vld [vmem:[%s10 + $0x88] sm:$0xff]
  %v1855 = vld [vmem:[%s10 + $0x90] sm:$0xff]
  %v1856 = vld [vmem:[%s10 + $0x98] sm:$0xff]
  %v1857 = vld [vmem:[%s10 + $0xa0] sm:$0xff]
  %v1858 = vld [vmem:[%s10 + $0xa8] sm:$0xff]
  %v1859 = vld [vmem:[%s10 + $0xb0] sm:$0xff]
  %v1860 = vld [vmem:[%s10 + $0xb8] sm:$0xff]
  %v1861 = vld [vmem:[%s10 + $0xc0] sm:$0xff]
  %v1862 = vld [vmem:[%s10 + $0xc8] sm:$0xff]
  %v1863 = vld [vmem:[%s10 + $0xd0] sm:$0xff]
  %v1864 = vld [vmem:[%s10 + $0xd8] sm:$0xff]
  %v1865 = vld [vmem:[%s10 + $0xe0] sm:$0xff]
  %v1866 = vld [vmem:[%s10 + $0xe8] sm:$0xff]
  %v1867 = vld [vmem:[%s10 + $0xf0] sm:$0xff]
  %v1868 = vld [vmem:[%s10 + $0xf8] sm:$0xff]
  %v1869 = vld [vmem:[%s12 + $0x22] ss:$0 sm:$0xff]
  %1870 = vmatprep.subr.mxu0 0.0
  %1871 = vmatpush1.msra.mxu0 %v1837
  %1872 = vmatprep.subr.mxu0 0.0
  %1873 = vmatpush1.msra.mxu0 %v1838
  %1874 = vmatprep.subr.mxu0 0.0
  %1875 = vmatpush1.msra.mxu0 %v1839
  %1876 = vmatprep.subr.mxu0 0.0
  %1877 = vmatpush1.msra.mxu0 %v1840
  %1878 = vmatprep.subr.mxu0 0.0
  %1879 = vmatpush1.msra.mxu0 %v1841
  %1880 = vmatprep.subr.mxu0 0.0
  %1881 = vmatpush1.msra.mxu0 %v1842
  %1882 = vmatprep.subr.mxu0 0.0
  %1883 = vmatpush1.msra.mxu0 %v1843
  %1884 = vmatprep.subr.mxu0 0.0
  %1885 = vmatpush1.msra.mxu0 %v1844
  %1886 = vmatprep.subr.mxu0 0.0
  %1887 = vmatpush1.msra.mxu0 %v1845
  %1888 = vmatprep.subr.mxu0 0.0
  %1889 = vmatpush1.msra.mxu0 %v1846
  %1890 = vmatprep.subr.mxu0 0.0
  %1891 = vmatpush1.msra.mxu0 %v1847
  %1892 = vmatprep.subr.mxu0 0.0
  %1893 = vmatpush1.msra.mxu0 %v1848
  %1894 = vmatprep.subr.mxu0 0.0
  %1895 = vmatpush1.msra.mxu0 %v1849
  %1896 = vmatprep.subr.mxu0 0.0
  %1897 = vmatpush1.msra.mxu0 %v1850
  %1898 = vmatprep.subr.mxu0 0.0
  %1899 = vmatpush1.msra.mxu0 %v1851
  %1900 = vmatprep.subr.mxu0 0.0
  %1901 = vmatpush1.msra.mxu0 %v1852
  %1902 = vmatprep.subr.mxu0 0.0
  %1903 = vmatpush1.msra.mxu0 %v1853
  %1904 = vmatprep.subr.mxu0 0.0
  %1905 = vmatpush1.msra.mxu0 %v1854
  %1906 = vmatprep.subr.mxu0 0.0
  %1907 = vmatpush1.msra.mxu0 %v1855
  %1908 = vmatprep.subr.mxu0 0.0
  %1909 = vmatpush1.msra.mxu0 %v1856
  %1910 = vmatprep.subr.mxu0 0.0
  %1911 = vmatpush1.msra.mxu0 %v1857
  %1912 = vmatprep.subr.mxu0 0.0
  %1913 = vmatpush1.msra.mxu0 %v1858
  %1914 = vmatprep.subr.mxu0 0.0
  %1915 = vmatpush1.msra.mxu0 %v1859
  %1916 = vmatprep.subr.mxu0 0.0
  %1917 = vmatpush1.msra.mxu0 %v1860
  %1918 = vmatprep.subr.mxu0 0.0
  %1919 = vmatpush1.msra.mxu0 %v1861
  %1920 = vmatprep.subr.mxu0 0.0
  %1921 = vmatpush1.msra.mxu0 %v1862
  %1922 = vmatprep.subr.mxu0 0.0
  %1923 = vmatpush1.msra.mxu0 %v1863
  %1924 = vmatprep.subr.mxu0 0.0
  %1925 = vmatpush1.msra.mxu0 %v1864
  %1926 = vmatprep.subr.mxu0 0.0
  %1927 = vmatpush1.msra.mxu0 %v1865
  %1928 = vmatprep.subr.mxu0 0.0
  %1929 = vmatpush1.msra.mxu0 %v1866
  %1930 = vmatprep.subr.mxu0 0.0
  %1931 = vmatpush1.msra.mxu0 %v1867
  %1932 = vmatprep.subr.mxu0 0.0
  %1933 = vmatpush1.msra.mxu0 %v1868
  %1934 = vmatprep.mubr.f32.mxu0 %v1836
  %1935 = vmatmul.mubr.f32.gmra.mrb[0].mxu0 %v1835
  %v1936 = vpop.f32.mrb[0].mxu0
  %v1937 = vadd.f32 %v1869, %v1936
  %v1938 = vpop.f32.mrb[0].mxu0
  %1939 = vdwg.mxu0
  %v1940 = vmax.f32 %v1937, 0.0
  %v1941 = vld [vmem:[%s11] sm:$0xff]
  %v1942 = vld [vmem:[%s11 + $0x8] sm:$0xff]
  %v1943 = vld [vmem:[%s11 + $0x10] sm:$0xff]
  %v1944 = vld [vmem:[%s11 + $0x18] sm:$0xff]
  %v1945 = vld [vmem:[%s11 + $0x20] sm:$0xff]
  %v1946 = vld [vmem:[%s11 + $0x28] sm:$0xff]
  %v1947 = vld [vmem:[%s11 + $0x30] sm:$0xff]
  %v1948 = vld [vmem:[%s11 + $0x38] sm:$0xff]
  %v1949 = vld [vmem:[%s11 + $0x40] sm:$0xff]
  %v1950 = vld [vmem:[%s11 + $0x48] sm:$0xff]
  %v1951 = vld [vmem:[%s11 + $0x50] sm:$0xff]
  %v1952 = vld [vmem:[%s11 + $0x58] sm:$0xff]
  %v1953 = vld [vmem:[%s11 + $0x60] sm:$0xff]
  %v1954 = vld [vmem:[%s11 + $0x68] sm:$0xff]
  %v1955 = vld [vmem:[%s11 + $0x70] sm:$0xff]
  %v1956 = vld [vmem:[%s11 + $0x78] sm:$0xff]
  %v1957 = vld [vmem:[%s12 + $0x23] ss:$0 sm:$0xff]
  %1958 = vmatprep.subr.mxu0 0.0
  %1959 = vmatpush1.msra.mxu0 %v1941
  %1960 = vmatprep.subr.mxu0 0.0
  %1961 = vmatpush1.msra.mxu0 %v1942
  %1962 = vmatprep.subr.mxu0 0.0
  %1963 = vmatpush1.msra.mxu0 %v1943
  %1964 = vmatprep.subr.mxu0 0.0
  %1965 = vmatpush1.msra.mxu0 %v1944
  %1966 = vmatprep.subr.mxu0 0.0
  %1967 = vmatpush1.msra.mxu0 %v1945
  %1968 = vmatprep.subr.mxu0 0.0
  %1969 = vmatpush1.msra.mxu0 %v1946
  %1970 = vmatprep.subr.mxu0 0.0
  %1971 = vmatpush1.msra.mxu0 %v1947
  %1972 = vmatprep.subr.mxu0 0.0
  %1973 = vmatpush1.msra.mxu0 %v1948
  %1974 = vmatprep.subr.mxu0 0.0
  %1975 = vmatpush1.msra.mxu0 %v1949
  %1976 = vmatprep.subr.mxu0 0.0
  %1977 = vmatpush1.msra.mxu0 %v1950
  %1978 = vmatprep.subr.mxu0 0.0
  %1979 = vmatpush1.msra.mxu0 %v1951
  %1980 = vmatprep.subr.mxu0 0.0
  %1981 = vmatpush1.msra.mxu0 %v1952
  %1982 = vmatprep.subr.mxu0 0.0
  %1983 = vmatpush1.msra.mxu0 %v1953
  %1984 = vmatprep.subr.mxu0 0.0
  %1985 = vmatpush1.msra.mxu0 %v1954
  %1986 = vmatprep.subr.mxu0 0.0
  %1987 = vmatpush1.msra.mxu0 %v1955
  %1988 = vmatprep.subr.mxu0 0.0
  %1989 = vmatpush1.msra.mxu0 %v1956
  %1990 = vmatprep.subr.mxu0 0.0
  %1991 = vmatpush1.msra.mxu0 0.0
  %1992 = vmatprep.subr.mxu0 0.0
  %1993 = vmatpush1.msra.mxu0 0.0
  %1994 = vmatprep.subr.mxu0 0.0
  %1995 = vmatpush1.msra.mxu0 0.0
  %1996 = vmatprep.subr.mxu0 0.0
  %1997 = vmatpush1.msra.mxu0 0.0
  %1998 = vmatprep.subr.mxu0 0.0
  %1999 = vmatpush1.msra.mxu0 0.0
  %2000 = vmatprep.subr.mxu0 0.0
  %2001 = vmatpush1.msra.mxu0 0.0
  %2002 = vmatprep.subr.mxu0 0.0
  %2003 = vmatpush1.msra.mxu0 0.0
  %2004 = vmatprep.subr.mxu0 0.0
  %2005 = vmatpush1.msra.mxu0 0.0
  %2006 = vmatprep.subr.mxu0 0.0
  %2007 = vmatpush1.msra.mxu0 0.0
  %2008 = vmatprep.subr.mxu0 0.0
  %2009 = vmatpush1.msra.mxu0 0.0
  %2010 = vmatprep.subr.mxu0 0.0
  %2011 = vmatpush1.msra.mxu0 0.0
  %2012 = vmatprep.subr.mxu0 0.0
  %2013 = vmatpush1.msra.mxu0 0.0
  %2014 = vmatprep.subr.mxu0 0.0
  %2015 = vmatpush1.msra.mxu0 0.0
  %2016 = vmatprep.subr.mxu0 0.0
  %2017 = vmatpush1.msra.mxu0 0.0
  %2018 = vmatprep.subr.mxu0 0.0
  %2019 = vmatpush1.msra.mxu0 0.0
  %2020 = vmatprep.subr.mxu0 0.0
  %2021 = vmatpush1.msra.mxu0 0.0
  %2022 = vmatprep.mubr.f32.mxu0 0.0
  %2023 = vmatmul.mubr.f32.gmra.mrb[0].mxu0 %v1940
  %v2024 = vpop.f32.mrb[0].mxu0
  %v2025 = vadd.f32 %v1957, %v2024
  %v2026 = vpop.f32.mrb[0].mxu0
  %2027 = vdwg.mxu0
  %2028 = vmax.xlane.f32.xlu0 %v2025
  %v2029 = vpop.xlane.xlu0 %2028
  %v2030 = vsub.f32 %v2025, %v2029
  %v2031 = vmul.f32 %v2030, 1.442695
  %v2032 = vpow.pop %v2031
  %2033 = vadd.xlane.f32.xlu0 %v2032
  %v2034 = vpop.xlane.xlu0 %2033
  %v2035 = vlog2.pop %v2034
  %v2036 = vmul.f32 %v2035, 0.6931472
  %v2037 = vadd.f32 %v2029, %v2036
  %v2038 = vlaneseq
  %v2039 = vand.u32 %v2038, 127
  %v2040 = vld [vmem:[%s1] sm:$0xff]
  %2041 = vset.pattern.permute.xlu0 0
  %2042 = vperm.xlu0 %2041, %v2040
  %v2043 = vpop.permute.xlu0 %2042
  %vm2044 = vcmp.eq.s32.totalorder %v2039, %v2043
  %v2045 = vsel %vm2044, 1, 0
  %v2046 = vcvt.s32.f32 %v2045
  %v2047 = vmul.f32 %v2025, %v2046
  %2048 = vadd.xlane.f32.xlu0 %v2047
  %v2049 = vpop.xlane.xlu0 %2048
  %v2050 = vsub.f32 %v2037, %v2049
  %vm2051 = vcmp.eq.s32.totalorder %v2039, 42
  %v2052 = vsel %vm2051, %v2050, %v2025
  %2053 = vst [vmem:[%s13] sm:$0xff] %v2052
  // Predicated region
  $region54: #{songs_years_forward.1} parent=0 // pred_check
    _
  $region55: #{songs_years_forward.1} parent=0 // pred_check_branch
    %2055 = sbr.rel (0) target = $region57
  $region56: #{songs_years_forward.1} parent=0 // pred_region
    _
  $region57: #{songs_years_forward.1} parent=0 // pred_fallthru
    _
  // Predicated region
  $region58: #{songs_years_forward.1} parent=0 // pred_check
    _
  $region59: #{songs_years_forward.1} parent=0 // pred_check_branch
    %2057 = sbr.rel (0) target = $region61
  $region60: #{songs_years_forward.1} parent=0 // pred_region
    _
  $region61: #{songs_years_forward.1} parent=0 // pred_fallthru
    _

</llo_original>
